<compile_context>
chip_gen: v7x
topology: tpu7x:2x2x1
jax: 0.10.0
libtpu: 0.0.40
codegen_flags: <defaults>
</compile_context>

<pallas_src>
import jax
import jax.numpy as jnp
from jax import lax
from jax.experimental import pallas as pl
from jax.experimental.pallas import tpu as pltpu

# ----- small, self-consistent hyperparameters (args.* stand-ins) -------------
TEXT_DIM = 32            # args.text_dim
EMB_DIM = 32             # args.emb_dim
HIDDEN = 512             # classifier hidden width (hard-coded 512 in module)
N_CITY = 16              # args.n_classes_city
N_COUNTRY = 8            # args.n_classes_country
N_CONTINENT = 8          # args.n_classes_continent
N_TOTAL = N_CITY + N_COUNTRY + N_CONTINENT   # 32
HEADS_HIDDEN = 3 * HIDDEN                    # 1536
BATCH = 8

# TODO(synk): nn.Dropout has no effect in eval mode; implemented as identity.


def _t2bert_kernel(x_ref, wtrunk_ref, wh1_ref, wh2_ref, bias_ref, out_ref):
    # ----- trunk (LearnText): Linear -> ReLU -> Linear -> Tanh -> Norm -------
    x = x_ref[...].astype(jnp.bfloat16)                       # (TB, 2*text_dim)

    w1 = wtrunk_ref[0:2 * TEXT_DIM, :]                        # (64, 32)  bf16
    w2 = wtrunk_ref[2 * TEXT_DIM:2 * TEXT_DIM + EMB_DIM, :]   # (32, 32)  bf16
    b1 = bias_ref[0:1, 0:EMB_DIM]                             # (1, 32)   f32
    b2 = bias_ref[1:2, 0:EMB_DIM]                             # (1, 32)   f32
    bh1 = bias_ref[2:3, :]                                    # (1, 1536) f32
    bh2 = bias_ref[3:4, 0:N_TOTAL]                            # (1, 32)   f32

    h = jnp.dot(x, w1, preferred_element_type=jnp.float32) + b1
    h = jnp.maximum(h, 0.0)                                   # ReLU (f32 VPU)
    e = jnp.dot(h.astype(jnp.bfloat16), w2,
                preferred_element_type=jnp.float32) + b2
    e = jnp.tanh(e)                                           # Tanh (EUP)

    # Norm: e / clamp(||e||_2, 1e-12)  ==  e * rsqrt(max(sum(e^2), 1e-24))
    sumsq = jnp.sum(e * e, axis=1, keepdims=True)
    e = e * lax.rsqrt(jnp.maximum(sumsq, 1e-24))

    # ----- three classifier heads, fused -------------------------------------
    # head layer 1: one lane-dense (emb, 1536) matmul for city|country|continent
    z = jnp.dot(e.astype(jnp.bfloat16), wh1_ref[...],
                preferred_element_type=jnp.float32) + bh1     # (TB, 1536)
    z = jnp.maximum(z, 0.0)                                   # ReLU (Dropout=id)
    # head layer 2: single block-diagonal (1536, 32) matmul -> (TB, 32) slab
    out = jnp.dot(z.astype(jnp.bfloat16), wh2_ref[...],
                  preferred_element_type=jnp.float32) + bh2
    out_ref[...] = out


def pack_params(p):
    """Pack the 16 torch-layout params into 4 slabs (weights in bf16)."""
    # trunk weights stacked along rows: rows 0:64 = W1, rows 64:96 = W2
    w_trunk = jnp.concatenate([p["w1"], p["w2"]], axis=0).astype(jnp.bfloat16)

    # heads layer-1 weights concatenated along output lanes -> (emb, 1536)
    w_h1 = jnp.concatenate([p["wc1"], p["wk1"], p["wn1"]],
                           axis=1).astype(jnp.bfloat16)

    # heads layer-2 weights as a block-diagonal (1536, 32) matrix
    w_h2 = jnp.zeros((HEADS_HIDDEN, N_TOTAL), jnp.float32)
    w_h2 = w_h2.at[0:HIDDEN, 0:N_CITY].set(p["wc2"])
    w_h2 = w_h2.at[HIDDEN:2 * HIDDEN, N_CITY:N_CITY + N_COUNTRY].set(p["wk2"])
    w_h2 = w_h2.at[2 * HIDDEN:3 * HIDDEN, N_CITY + N_COUNTRY:N_TOTAL].set(p["wn2"])
    w_h2 = w_h2.astype(jnp.bfloat16)

    # all biases in one f32 (4, 1536) slab (zero-padded rows)
    bias = jnp.zeros((4, HEADS_HIDDEN), jnp.float32)
    bias = bias.at[0, 0:EMB_DIM].set(p["b1"][0])
    bias = bias.at[1, 0:EMB_DIM].set(p["b2"][0])
    bias = bias.at[2, :].set(
        jnp.concatenate([p["bc1"], p["bk1"], p["bn1"]], axis=1)[0])
    bias = bias.at[3, 0:N_TOTAL].set(
        jnp.concatenate([p["bc2"], p["bk2"], p["bn2"]], axis=1)[0])

    return w_trunk, w_h1, w_h2, bias


def t_2bert_forward(t1, t2, packed):
    w_trunk, w_h1, w_h2, bias = packed
    # concat in XLA so the kernel input is a single lane-contiguous (B, 64) tile
    x = jnp.concatenate([t1, t2], axis=1)
    B = x.shape[0]

    # batch tiling: one block for small batches; 512-row tiles (sharded across
    # TensorCores on v7x via "parallel") for large batches.
    tile_b = B if B <= 512 else 512
    grid_b = pl.cdiv(B, tile_b)

    const_spec = lambda arr: pl.BlockSpec(arr.shape, lambda i: (0, 0))

    out = pl.pallas_call(
        _t2bert_kernel,
        grid=(grid_b,),
        in_specs=[
            pl.BlockSpec((tile_b, 2 * TEXT_DIM), lambda i: (i, 0)),
            const_spec(w_trunk),
            const_spec(w_h1),
            const_spec(w_h2),
            const_spec(bias),
        ],
        out_specs=pl.BlockSpec((tile_b, N_TOTAL), lambda i: (i, 0)),
        out_shape=jax.ShapeDtypeStruct((B, N_TOTAL), jnp.float32),
        compiler_params=pltpu.CompilerParams(
            dimension_semantics=("parallel",)),
    )(x, w_trunk, w_h1, w_h2, bias)

    city = out[:, 0:N_CITY]
    country = out[:, N_CITY:N_CITY + N_COUNTRY]
    continent = out[:, N_CITY + N_COUNTRY:N_TOTAL]
    return city, country, continent


def init_params(key):
    """Deterministic synthetic parameters (shapes from module __init__)."""
    def lin(k, fan_in, fan_out):
        kw, kb = jax.random.split(k)
        bound = 1.0 / jnp.sqrt(fan_in)
        w = jax.random.uniform(kw, (fan_in, fan_out), jnp.float32, -bound, bound)
        b = jax.random.uniform(kb, (1, fan_out), jnp.float32, -bound, bound)
        return w, b

    keys = jax.random.split(key, 8)
    p = {}
    p["w1"], p["b1"] = lin(keys[0], 2 * TEXT_DIM, EMB_DIM)
    p["w2"], p["b2"] = lin(keys[1], EMB_DIM, EMB_DIM)
    p["wc1"], p["bc1"] = lin(keys[2], EMB_DIM, HIDDEN)
    p["wc2"], p["bc2"] = lin(keys[3], HIDDEN, N_CITY)
    p["wk1"], p["bk1"] = lin(keys[4], EMB_DIM, HIDDEN)
    p["wk2"], p["bk2"] = lin(keys[5], HIDDEN, N_COUNTRY)
    p["wn1"], p["bn1"] = lin(keys[6], EMB_DIM, HIDDEN)
    p["wn2"], p["bn2"] = lin(keys[7], HIDDEN, N_CONTINENT)
    return p


def _reference(t1, t2, p):
    """Pure-JAX f32 reference for a sanity check."""
    x = jnp.concatenate([t1, t2], axis=1)
    h = jnp.maximum(x @ p["w1"] + p["b1"], 0.0)
    e = jnp.tanh(h @ p["w2"] + p["b2"])
    e = e / jnp.maximum(jnp.linalg.norm(e, axis=1, keepdims=True), 1e-12)

    def head(wA, bA, wB, bB):
        return jnp.maximum(e @ wA + bA, 0.0) @ wB + bB

    return (head(p["wc1"], p["bc1"], p["wc2"], p["bc2"]),
            head(p["wk1"], p["bk1"], p["wk2"], p["bk2"]),
            head(p["wn1"], p["bn1"], p["wn2"], p["bn2"]))


if __name__ == "__main__":
    key = jax.random.PRNGKey(0)
    k1, k2, kp = jax.random.split(key, 3)
    t1 = jax.random.normal(k1, (BATCH, TEXT_DIM), jnp.float32)
    t2 = jax.random.normal(k2, (BATCH, TEXT_DIM), jnp.float32)
    params = init_params(kp)
    packed = pack_params(params)   # pack / cast once, outside the hot path

    city, country, continent = jax.block_until_ready(
        t_2bert_forward(t1, t2, packed))

    ref_city, ref_country, ref_continent = _reference(t1, t2, params)
    assert city.shape == (BATCH, N_CITY)
    assert country.shape == (BATCH, N_COUNTRY)
    assert continent.shape == (BATCH, N_CONTINENT)
    # bf16 weights at the MXU boundary -> loosened tolerance vs f32 reference.
    assert jnp.allclose(city, ref_city, atol=2e-2, rtol=2e-2)
    assert jnp.allclose(country, ref_country, atol=2e-2, rtol=2e-2)
    assert jnp.allclose(continent, ref_continent, atol=2e-2, rtol=2e-2)
    print("KERNEL_OK")
</pallas_src>

<mosaic_0001>
module attributes {stable_mosaic.version = 11 : i64} {
  func.func @_t2bert_kernel(%arg0: i32, %arg1: memref<8x64xf32, #tpu.memory_space<vmem>>, %arg2: memref<96x32xbf16, #tpu.memory_space<vmem>>, %arg3: memref<32x1536xbf16, #tpu.memory_space<vmem>>, %arg4: memref<1536x32xbf16, #tpu.memory_space<vmem>>, %arg5: memref<4x1536xf32, #tpu.memory_space<vmem>>, %arg6: memref<8x32xf32, #tpu.memory_space<vmem>>) attributes {dimension_semantics = [#tpu.dimension_semantics<parallel>], iteration_bounds = array<i64: 1>, scalar_prefetch = 0 : i64, scratch_operands = 0 : i64, tpu.core_type = #tpu.core_type<tc>, window_params = [{transform_indices = @transform_0, window_bounds = array<i64: 8, 64>}, {pipeline_mode = #tpu.pipeline_mode<synchronous>, transform_indices = @transform_1, window_bounds = array<i64: 96, 32>}, {pipeline_mode = #tpu.pipeline_mode<synchronous>, transform_indices = @transform_2, window_bounds = array<i64: 32, 1536>}, {pipeline_mode = #tpu.pipeline_mode<synchronous>, transform_indices = @transform_3, window_bounds = array<i64: 1536, 32>}, {pipeline_mode = #tpu.pipeline_mode<synchronous>, transform_indices = @transform_4, window_bounds = array<i64: 4, 1536>}, {transform_indices = @transform_5, window_bounds = array<i64: 8, 32>}]} {
    %c0 = arith.constant 0 : index
    %c0_0 = arith.constant 0 : index
    %0 = vector.load %arg1[%c0, %c0_0] : memref<8x64xf32, #tpu.memory_space<vmem>>, vector<8x64xf32>
    %1 = arith.truncf %0 : vector<8x64xf32> to vector<8x64xbf16>
    %c0_1 = arith.constant 0 : index
    %c0_2 = arith.constant 0 : index
    %2 = vector.load %arg2[%c0_1, %c0_2] : memref<96x32xbf16, #tpu.memory_space<vmem>>, vector<64x32xbf16>
    %c64 = arith.constant 64 : index
    %c0_3 = arith.constant 0 : index
    %3 = vector.load %arg2[%c64, %c0_3] : memref<96x32xbf16, #tpu.memory_space<vmem>>, vector<32x32xbf16>
    %c0_4 = arith.constant 0 : index
    %c0_5 = arith.constant 0 : index
    %4 = vector.load %arg5[%c0_4, %c0_5] : memref<4x1536xf32, #tpu.memory_space<vmem>>, vector<1x32xf32>
    %c1 = arith.constant 1 : index
    %c0_6 = arith.constant 0 : index
    %5 = vector.load %arg5[%c1, %c0_6] : memref<4x1536xf32, #tpu.memory_space<vmem>>, vector<1x32xf32>
    %c2 = arith.constant 2 : index
    %c0_7 = arith.constant 0 : index
    %6 = vector.load %arg5[%c2, %c0_7] : memref<4x1536xf32, #tpu.memory_space<vmem>>, vector<1x1536xf32>
    %c3 = arith.constant 3 : index
    %c0_8 = arith.constant 0 : index
    %7 = vector.load %arg5[%c3, %c0_8] : memref<4x1536xf32, #tpu.memory_space<vmem>>, vector<1x32xf32>
    %cst = arith.constant dense<0.000000e+00> : vector<8x32xf32>
    %8 = tpu.matmul %1, %2, %cst {dimension_numbers = #tpu.dot_dimension_numbers<[1], [0], [0], [1], [0, 0, 1, 1], [], []>} : vector<8x64xbf16>, vector<64x32xbf16>, vector<8x32xf32> -> vector<8x32xf32>
    %9 = vector.broadcast %4 : vector<1x32xf32> to vector<8x32xf32>
    %10 = arith.addf %8, %9 : vector<8x32xf32>
    %cst_9 = arith.constant 0.000000e+00 : f32
    %11 = vector.broadcast %cst_9 : f32 to vector<8x32xf32>
    %12 = arith.maximumf %10, %11 : vector<8x32xf32>
    %13 = arith.truncf %12 : vector<8x32xf32> to vector<8x32xbf16>
    %cst_10 = arith.constant dense<0.000000e+00> : vector<8x32xf32>
    %14 = tpu.matmul %13, %3, %cst_10 {dimension_numbers = #tpu.dot_dimension_numbers<[1], [0], [0], [1], [0, 0, 1, 1], [], []>} : vector<8x32xbf16>, vector<32x32xbf16>, vector<8x32xf32> -> vector<8x32xf32>
    %15 = vector.broadcast %5 : vector<1x32xf32> to vector<8x32xf32>
    %16 = arith.addf %14, %15 : vector<8x32xf32>
    %17 = math.tanh %16 : vector<8x32xf32>
    %18 = arith.mulf %17, %17 : vector<8x32xf32>
    %cst_11 = arith.constant dense<0.000000e+00> : vector<8xf32>
    %19 = vector.multi_reduction <add>, %18, %cst_11 [1] : vector<8x32xf32> to vector<8xf32>
    %20 = vector.shape_cast %19 : vector<8xf32> to vector<8x1xf32>
    %cst_12 = arith.constant 1.000000e-24 : f32
    %21 = vector.broadcast %cst_12 : f32 to vector<8x1xf32>
    %22 = arith.maximumf %20, %21 : vector<8x1xf32>
    %23 = math.rsqrt %22 : vector<8x1xf32>
    %24 = vector.broadcast %23 : vector<8x1xf32> to vector<8x32xf32>
    %25 = arith.mulf %17, %24 : vector<8x32xf32>
    %26 = arith.truncf %25 : vector<8x32xf32> to vector<8x32xbf16>
    %c0_13 = arith.constant 0 : index
    %c0_14 = arith.constant 0 : index
    %27 = vector.load %arg3[%c0_13, %c0_14] : memref<32x1536xbf16, #tpu.memory_space<vmem>>, vector<32x1536xbf16>
    %cst_15 = arith.constant dense<0.000000e+00> : vector<8x1536xf32>
    %28 = tpu.matmul %26, %27, %cst_15 {dimension_numbers = #tpu.dot_dimension_numbers<[1], [0], [0], [1], [0, 0, 1, 1], [], []>} : vector<8x32xbf16>, vector<32x1536xbf16>, vector<8x1536xf32> -> vector<8x1536xf32>
    %29 = vector.broadcast %6 : vector<1x1536xf32> to vector<8x1536xf32>
    %30 = arith.addf %28, %29 : vector<8x1536xf32>
    %cst_16 = arith.constant 0.000000e+00 : f32
    %31 = vector.broadcast %cst_16 : f32 to vector<8x1536xf32>
    %32 = arith.maximumf %30, %31 : vector<8x1536xf32>
    %33 = arith.truncf %32 : vector<8x1536xf32> to vector<8x1536xbf16>
    %c0_17 = arith.constant 0 : index
    %c0_18 = arith.constant 0 : index
    %34 = vector.load %arg4[%c0_17, %c0_18] : memref<1536x32xbf16, #tpu.memory_space<vmem>>, vector<1536x32xbf16>
    %cst_19 = arith.constant dense<0.000000e+00> : vector<8x32xf32>
    %35 = tpu.matmul %33, %34, %cst_19 {dimension_numbers = #tpu.dot_dimension_numbers<[1], [0], [0], [1], [0, 0, 1, 1], [], []>} : vector<8x1536xbf16>, vector<1536x32xbf16>, vector<8x32xf32> -> vector<8x32xf32>
    %36 = vector.broadcast %7 : vector<1x32xf32> to vector<8x32xf32>
    %37 = arith.addf %35, %36 : vector<8x32xf32>
    %c0_20 = arith.constant 0 : index
    %c0_21 = arith.constant 0 : index
    %38 = vector.load %arg6[%c0_20, %c0_21] : memref<8x32xf32, #tpu.memory_space<vmem>>, vector<8x32xf32>
    tpu.vector_store %arg6[%c0_20, %c0_21], %37 {strides = array<i32>} : memref<8x32xf32, #tpu.memory_space<vmem>>, vector<8x32xf32>,
    return
  }
  func.func @transform_0(%arg0: i32) -> (i32, i32) {
    %c0_i32 = arith.constant 0 : i32
    %c0_i32_0 = arith.constant 0 : i32
    return %arg0, %c0_i32 : i32, i32
  }
  func.func @transform_1(%arg0: i32) -> (i32, i32) {
    %c0_i32 = arith.constant 0 : i32
    %c0_i32_0 = arith.constant 0 : i32
    %c0_i32_1 = arith.constant 0 : i32
    return %c0_i32, %c0_i32_0 : i32, i32
  }
  func.func @transform_2(%arg0: i32) -> (i32, i32) {
    %c0_i32 = arith.constant 0 : i32
    %c0_i32_0 = arith.constant 0 : i32
    %c0_i32_1 = arith.constant 0 : i32
    return %c0_i32, %c0_i32_0 : i32, i32
  }
  func.func @transform_3(%arg0: i32) -> (i32, i32) {
    %c0_i32 = arith.constant 0 : i32
    %c0_i32_0 = arith.constant 0 : i32
    %c0_i32_1 = arith.constant 0 : i32
    return %c0_i32, %c0_i32_0 : i32, i32
  }
  func.func @transform_4(%arg0: i32) -> (i32, i32) {
    %c0_i32 = arith.constant 0 : i32
    %c0_i32_0 = arith.constant 0 : i32
    %c0_i32_1 = arith.constant 0 : i32
    return %c0_i32, %c0_i32_0 : i32, i32
  }
  func.func @transform_5(%arg0: i32) -> (i32, i32) {
    %c0_i32 = arith.constant 0 : i32
    %c0_i32_0 = arith.constant 0 : i32
    return %arg0, %c0_i32 : i32, i32
  }
}

</mosaic_0001>

<llo_original>
// kernel: tpu_custom_call.1
$region0: #{tpu_custom_call.1}
  #allocation0 [shape = 'u32[]', space=smem, size = 0x4, offset = 0x4, fixed_abs, tag = 'smem constant byte address 0x4 - core index']
  #allocation1 [shape = 'u32[144,128]{1,0:T(1,128)}', space=vmem, size = 0x12000, scoped, tag = 'internal scratch']
  %s0 = inlined_call_operand.vmem [shape: f32[8,64], index: 0, kind: input, shape index: {}]
  %s1 = inlined_call_operand.vmem [shape: bf16[96,32], index: 1, kind: input, shape index: {}]
  %s2 = inlined_call_operand.vmem [shape: bf16[32,1536], index: 2, kind: input, shape index: {}]
  %s3 = inlined_call_operand.vmem [shape: bf16[1536,32], index: 3, kind: input, shape index: {}]
  %s4 = inlined_call_operand.vmem [shape: f32[4,1536], index: 4, kind: input, shape index: {}]
  %s5 = inlined_call_operand.hbm [shape: f32[8,32], index: 5, kind: output, shape index: {}]
  %s6 = sld [smem:[#allocation0]]
  $region30: #{tpu_custom_call.1} parent=0
    _
  %s8 = ssub.s32 1, %s6
  %s9 = scalar_select 0, %s8, %s6
  $region1: #{tpu_custom_call.1} parent=0
    #allocation2 [shape = 'u8[4096]{0}', space=vmem, size = 0x1000, scoped, tag = 'output window, operand 0, single buffered']
    #allocation3 [shape = 's32[1]{0}', space=sflag, size = 0x4, scoped, tag = 'scoped memory for tpu_custom_call.1']
    %10 = vsyncpa [#allocation3], 0
    // Predicated region
    $region2: #{tpu_custom_call.1} parent=1 // pred_check
      _
    $region3: #{tpu_custom_call.1} parent=1 // pred_check_branch
      %12 = sbr.rel (0) target = $region5
    $region4: #{tpu_custom_call.1} parent=1 // pred_region
      _
    $region5: #{tpu_custom_call.1} parent=1 // pred_fallthru
      _
    // Predicated region
    $region6: #{tpu_custom_call.1} parent=1 // pred_check
      _
    $region7: #{tpu_custom_call.1} parent=1 // pred_check_branch
      %14 = sbr.rel (0) target = $region9
    $region8: #{tpu_custom_call.1} parent=1 // pred_region
      _
    $region9: #{tpu_custom_call.1} parent=1 // pred_fallthru
      _
    // Predicated region
    $region10: #{tpu_custom_call.1} parent=1 // pred_check
      _
    $region11: #{tpu_custom_call.1} parent=1 // pred_check_branch
      %16 = sbr.rel (0) target = $region13
    $region12: #{tpu_custom_call.1} parent=1 // pred_region
      _
    $region13: #{tpu_custom_call.1} parent=1 // pred_fallthru
      _
    // Predicated region
    $region14: #{tpu_custom_call.1} parent=1 // pred_check
      _
    $region15: #{tpu_custom_call.1} parent=1 // pred_check_branch
      %18 = sbr.rel (0) target = $region17
    $region16: #{tpu_custom_call.1} parent=1 // pred_region
      _
    $region17: #{tpu_custom_call.1} parent=1 // pred_fallthru
      _
    // Predicated region
    $region18: #{tpu_custom_call.1} parent=1 // pred_check
      _
    $region19: #{tpu_custom_call.1} parent=1 // pred_check_branch
      %20 = sbr.rel (0) target = $region21
    $region20: #{tpu_custom_call.1} parent=1 // pred_region
      _
    $region21: #{tpu_custom_call.1} parent=1 // pred_fallthru
      _
    %v22 = vld [vmem:[%s0] sm:$0xff]
    %v23 = vpack.c.bf16 %v22, %v22
    %v24 = vld [vmem:[%s1] sm:$0xf]
    %v25 = vld [vmem:[%s1 + $0x4] sm:$0xf]
    %v26 = vld [vmem:[%s1 + $0x8] sm:$0xf]
    %v27 = vld [vmem:[%s1 + $0xc] sm:$0xf]
    %v28 = vld [vmem:[%s1 + $0x10] sm:$0xf]
    %v29 = vld [vmem:[%s1 + $0x14] sm:$0xf]
    %v30 = vld [vmem:[%s1 + $0x18] sm:$0xf]
    %v31 = vld [vmem:[%s1 + $0x1c] sm:$0xf]
    %v32 = vld [vmem:[%s1 + $0x20] sm:$0xf]
    %v33 = vld [vmem:[%s1 + $0x24] sm:$0xf]
    %v34 = vld [vmem:[%s1 + $0x28] sm:$0xf]
    %v35 = vld [vmem:[%s1 + $0x2c] sm:$0xf]
    %v36 = vld [vmem:[%s4] sm:$0x1]
    %v37 = vld [vmem:[%s4 + $0x1] sm:$0x1]
    %s38 = scalar_lea.vmem %s4, 2
    %v39 = vld [vmem:[%s38] ss:$4 sm:$0xff]
    %s40 = scalar_lea.vmem %s4, 34
    %v41 = vld [vmem:[%s40] ss:$4 sm:$0xf]
    %v42 = vld [vmem:[%s4 + $0x3] sm:$0x1]
    %v43 = vlaneseq
    %v44 = vshrl.u32 %v43, 7
    %v45 = vsub.s32 0, %v44
    %v46 = vrot.slane %v36, %v45
    %v55 = vunpack.c.l.b16 %v24
    %v56 = vunpack.c.l.b16 %v25
    %v57 = vunpack.c.l.b16 %v26
    %v58 = vunpack.c.l.b16 %v27
    %v59 = vunpack.c.l.b16 %v28
    %v60 = vunpack.c.l.b16 %v29
    %v61 = vunpack.c.l.b16 %v30
    %v62 = vunpack.c.l.b16 %v31
    %v63 = vpack.c.b16 %v56, %v55
    %v64 = vpack.c.b16 %v58, %v57
    %v65 = vpack.c.b16 %v60, %v59
    %v66 = vpack.c.b16 %v62, %v61
    %vm71 = vcmask 523264
    %v73 = vsel %vm71, %v23, 0
    %75 = vmatprep.subr.bf16.mxu0 0
    %76 = vmatpush1.bf16.msra.mxu0 %v63
    %77 = vmatprep.subr.bf16.mxu0 0
    %78 = vmatpush1.bf16.msra.mxu0 %v64
    %79 = vmatprep.subr.bf16.mxu0 0
    %80 = vmatpush1.bf16.msra.mxu0 %v65
    %81 = vmatprep.subr.bf16.mxu0 0
    %82 = vmatpush1.bf16.msra.mxu0 %v66
    %83 = vmatprep.subr.bf16.mxu0 0
    %84 = vmatpush1.bf16.msra.mxu0 0
    %85 = vmatprep.subr.bf16.mxu0 0
    %86 = vmatpush1.bf16.msra.mxu0 0
    %87 = vmatprep.subr.bf16.mxu0 0
    %88 = vmatpush1.bf16.msra.mxu0 0
    %89 = vmatprep.subr.bf16.mxu0 0
    %90 = vmatpush1.bf16.msra.mxu0 0
    %91 = vmatprep.subr.bf16.mxu0 0
    %92 = vmatpush1.bf16.msra.mxu0 0
    %93 = vmatprep.subr.bf16.mxu0 0
    %94 = vmatpush1.bf16.msra.mxu0 0
    %95 = vmatprep.subr.bf16.mxu0 0
    %96 = vmatpush1.bf16.msra.mxu0 0
    %97 = vmatprep.subr.bf16.mxu0 0
    %98 = vmatpush1.bf16.msra.mxu0 0
    %99 = vmatprep.subr.bf16.mxu0 0
    %100 = vmatpush1.bf16.msra.mxu0 0
    %101 = vmatprep.subr.bf16.mxu0 0
    %102 = vmatpush1.bf16.msra.mxu0 0
    %103 = vmatprep.subr.bf16.mxu0 0
    %104 = vmatpush1.bf16.msra.mxu0 0
    %105 = vmatprep.subr.bf16.mxu0 0
    %106 = vmatpush1.bf16.msra.mxu0 0
    %107 = vmatprep.mubr.bf16.mxu0 0
    %108 = vmatmul.mubr.bf16.gmra.mrb[0].mxu0 %v73
    %v109 = vpop.f32.mrb[0].mxu0
    %v110 = vadd.f32 %v46, %v109
    %v111 = vpop.f32.mrb[0].mxu0
    %v112 = vpop.f32.mrb[0].mxu0
    %v113 = vpop.f32.mrb[0].mxu0
    %114 = vdwg.mxu0
    %v115 = vmax.f32 %v110, 0.0
    %v116 = vpack.c.bf16 %v115, %v115
    %v117 = vlaneseq
    %v118 = vshrl.u32 %v117, 7
    %v119 = vsub.s32 0, %v118
    %v120 = vrot.slane %v37, %v119
    %v125 = vunpack.c.l.b16 %v32
    %v126 = vunpack.c.l.b16 %v33
    %v127 = vunpack.c.l.b16 %v34
    %v128 = vunpack.c.l.b16 %v35
    %v129 = vpack.c.b16 %v126, %v125
    %v130 = vpack.c.b16 %v128, %v127
    %vm133 = vcmask 261120
    %v135 = vsel %vm133, %v116, 0
    %137 = vmatprep.subr.bf16.mxu0 0
    %138 = vmatpush1.bf16.msra.mxu0 %v129
    %139 = vmatprep.subr.bf16.mxu0 0
    %140 = vmatpush1.bf16.msra.mxu0 %v130
    %141 = vmatprep.subr.bf16.mxu0 0
    %142 = vmatpush1.bf16.msra.mxu0 0
    %143 = vmatprep.subr.bf16.mxu0 0
    %144 = vmatpush1.bf16.msra.mxu0 0
    %145 = vmatprep.subr.bf16.mxu0 0
    %146 = vmatpush1.bf16.msra.mxu0 0
    %147 = vmatprep.subr.bf16.mxu0 0
    %148 = vmatpush1.bf16.msra.mxu0 0
    %149 = vmatprep.subr.bf16.mxu0 0
    %150 = vmatpush1.bf16.msra.mxu0 0
    %151 = vmatprep.subr.bf16.mxu0 0
    %152 = vmatpush1.bf16.msra.mxu0 0
    %153 = vmatprep.subr.bf16.mxu0 0
    %154 = vmatpush1.bf16.msra.mxu0 0
    %155 = vmatprep.subr.bf16.mxu0 0
    %156 = vmatpush1.bf16.msra.mxu0 0
    %157 = vmatprep.subr.bf16.mxu0 0
    %158 = vmatpush1.bf16.msra.mxu0 0
    %159 = vmatprep.subr.bf16.mxu0 0
    %160 = vmatpush1.bf16.msra.mxu0 0
    %161 = vmatprep.subr.bf16.mxu0 0
    %162 = vmatpush1.bf16.msra.mxu0 0
    %163 = vmatprep.subr.bf16.mxu0 0
    %164 = vmatpush1.bf16.msra.mxu0 0
    %165 = vmatprep.subr.bf16.mxu0 0
    %166 = vmatpush1.bf16.msra.mxu0 0
    %167 = vmatprep.subr.bf16.mxu0 0
    %168 = vmatpush1.bf16.msra.mxu0 0
    %169 = vmatprep.mubr.bf16.mxu0 0
    %170 = vmatmul.mubr.bf16.gmra.mrb[0].mxu0 %v135
    %v171 = vpop.f32.mrb[0].mxu0
    %v172 = vadd.f32 %v120, %v171
    %v173 = vpop.f32.mrb[0].mxu0
    %v174 = vpop.f32.mrb[0].mxu0
    %v175 = vpop.f32.mrb[0].mxu0
    %176 = vdwg.mxu0
    %v177 = vtanh.pop %v172
    %v178 = vmul.f32 %v177, %v177
    %v179 = vsel %vm133, %v178, 0.0
    %180 = vadd.xlane.f32.xlu0 %v179
    %v181 = vpop.xlane.xlu0 %180
    %v182 = vmax.f32 %v181, 1e-24
    %v183 = vrsqrt.pop %v182
    %v184 = vmul.f32 %v177, %v183
    %v185 = vpack.c.bf16 %v184, %v184
    %v186 = vld [vmem:[%s2] sm:$0xff]
    %v187 = vld [vmem:[%s2 + $0x8] sm:$0xff]
    %v188 = vld [vmem:[%s2 + $0x10] sm:$0xff]
    %v189 = vld [vmem:[%s2 + $0x18] sm:$0xff]
    %v190 = vld [vmem:[%s2 + $0x20] sm:$0xff]
    %v191 = vld [vmem:[%s2 + $0x28] sm:$0xff]
    %v192 = vld [vmem:[%s2 + $0x30] sm:$0xff]
    %v193 = vld [vmem:[%s2 + $0x38] sm:$0xff]
    %v194 = vld [vmem:[%s2 + $0x40] sm:$0xff]
    %v195 = vld [vmem:[%s2 + $0x48] sm:$0xff]
    %v196 = vld [vmem:[%s2 + $0x50] sm:$0xff]
    %v197 = vld [vmem:[%s2 + $0x58] sm:$0xff]
    %v198 = vld [vmem:[%s2 + $0x60] sm:$0xff]
    %v199 = vld [vmem:[%s2 + $0x68] sm:$0xff]
    %v200 = vld [vmem:[%s2 + $0x70] sm:$0xff]
    %v201 = vld [vmem:[%s2 + $0x78] sm:$0xff]
    %v202 = vld [vmem:[%s2 + $0x80] sm:$0xff]
    %v203 = vld [vmem:[%s2 + $0x88] sm:$0xff]
    %v204 = vld [vmem:[%s2 + $0x90] sm:$0xff]
    %v205 = vld [vmem:[%s2 + $0x98] sm:$0xff]
    %v206 = vld [vmem:[%s2 + $0xa0] sm:$0xff]
    %v207 = vld [vmem:[%s2 + $0xa8] sm:$0xff]
    %v208 = vld [vmem:[%s2 + $0xb0] sm:$0xff]
    %v209 = vld [vmem:[%s2 + $0xb8] sm:$0xff]
    %v212 = vlaneseq
    %v213 = vshrl.u32 %v212, 7
    %v214 = vsub.s32 0, %v213
    %v215 = vrot.slane %v39, %v214
    %v216 = vlaneseq
    %v217 = vshrl.u32 %v216, 7
    %v218 = vsub.s32 1, %v217
    %v219 = vrot.slane %v39, %v218
    %v220 = vlaneseq
    %v221 = vshrl.u32 %v220, 7
    %v222 = vsub.s32 2, %v221
    %v223 = vrot.slane %v39, %v222
    %v224 = vlaneseq
    %v225 = vshrl.u32 %v224, 7
    %v226 = vsub.s32 3, %v225
    %v227 = vrot.slane %v39, %v226
    %v228 = vlaneseq
    %v229 = vshrl.u32 %v228, 7
    %v230 = vsub.s32 4, %v229
    %v231 = vrot.slane %v39, %v230
    %v232 = vlaneseq
    %v233 = vshrl.u32 %v232, 7
    %v234 = vsub.s32 5, %v233
    %v235 = vrot.slane %v39, %v234
    %v236 = vlaneseq
    %v237 = vshrl.u32 %v236, 7
    %v238 = vsub.s32 6, %v237
    %v239 = vrot.slane %v39, %v238
    %v240 = vlaneseq
    %v241 = vshrl.u32 %v240, 7
    %v242 = vsub.s32 7, %v241
    %v243 = vrot.slane %v39, %v242
    %v244 = vlaneseq
    %v245 = vshrl.u32 %v244, 7
    %v246 = vsub.s32 0, %v245
    %v247 = vrot.slane %v41, %v246
    %v248 = vlaneseq
    %v249 = vshrl.u32 %v248, 7
    %v250 = vsub.s32 1, %v249
    %v251 = vrot.slane %v41, %v250
    %v252 = vlaneseq
    %v253 = vshrl.u32 %v252, 7
    %v254 = vsub.s32 2, %v253
    %v255 = vrot.slane %v41, %v254
    %v256 = vlaneseq
    %v257 = vshrl.u32 %v256, 7
    %v258 = vsub.s32 3, %v257
    %v259 = vrot.slane %v41, %v258
    %v296 = vunpack.c.l.b16 %v186
    %v297 = vunpack.c.h.b16 %v186
    %v298 = vunpack.c.l.b16 %v187
    %v299 = vunpack.c.h.b16 %v187
    %v300 = vunpack.c.l.b16 %v188
    %v301 = vunpack.c.h.b16 %v188
    %v302 = vunpack.c.l.b16 %v189
    %v303 = vunpack.c.h.b16 %v189
    %v304 = vunpack.c.l.b16 %v190
    %v305 = vunpack.c.h.b16 %v190
    %v306 = vunpack.c.l.b16 %v191
    %v307 = vunpack.c.h.b16 %v191
    %v308 = vunpack.c.l.b16 %v192
    %v309 = vunpack.c.h.b16 %v192
    %v310 = vunpack.c.l.b16 %v193
    %v311 = vunpack.c.h.b16 %v193
    %v312 = vunpack.c.l.b16 %v194
    %v313 = vunpack.c.h.b16 %v194
    %v314 = vunpack.c.l.b16 %v195
    %v315 = vunpack.c.h.b16 %v195
    %v316 = vunpack.c.l.b16 %v196
    %v317 = vunpack.c.h.b16 %v196
    %v318 = vunpack.c.l.b16 %v197
    %v319 = vunpack.c.h.b16 %v197
    %v320 = vunpack.c.l.b16 %v198
    %v321 = vunpack.c.h.b16 %v198
    %v322 = vunpack.c.l.b16 %v199
    %v323 = vunpack.c.h.b16 %v199
    %v324 = vunpack.c.l.b16 %v200
    %v325 = vunpack.c.h.b16 %v200
    %v326 = vunpack.c.l.b16 %v201
    %v327 = vunpack.c.h.b16 %v201
    %v328 = vunpack.c.l.b16 %v202
    %v329 = vunpack.c.h.b16 %v202
    %v330 = vunpack.c.l.b16 %v203
    %v331 = vunpack.c.h.b16 %v203
    %v332 = vunpack.c.l.b16 %v204
    %v333 = vunpack.c.h.b16 %v204
    %v334 = vunpack.c.l.b16 %v205
    %v335 = vunpack.c.h.b16 %v205
    %v336 = vunpack.c.l.b16 %v206
    %v337 = vunpack.c.h.b16 %v206
    %v338 = vunpack.c.l.b16 %v207
    %v339 = vunpack.c.h.b16 %v207
    %v340 = vunpack.c.l.b16 %v208
    %v341 = vunpack.c.h.b16 %v208
    %v342 = vunpack.c.l.b16 %v209
    %v343 = vunpack.c.h.b16 %v209
    %v344 = vpack.c.b16 %v308, %v296
    %v345 = vpack.c.b16 %v309, %v297
    %v346 = vpack.c.b16 %v310, %v298
    %v347 = vpack.c.b16 %v311, %v299
    %v348 = vpack.c.b16 %v312, %v300
    %v349 = vpack.c.b16 %v313, %v301
    %v350 = vpack.c.b16 %v314, %v302
    %v351 = vpack.c.b16 %v315, %v303
    %v352 = vpack.c.b16 %v316, %v304
    %v353 = vpack.c.b16 %v317, %v305
    %v354 = vpack.c.b16 %v318, %v306
    %v355 = vpack.c.b16 %v319, %v307
    %v356 = vpack.c.b16 %v332, %v320
    %v357 = vpack.c.b16 %v333, %v321
    %v358 = vpack.c.b16 %v334, %v322
    %v359 = vpack.c.b16 %v335, %v323
    %v360 = vpack.c.b16 %v336, %v324
    %v361 = vpack.c.b16 %v337, %v325
    %v362 = vpack.c.b16 %v338, %v326
    %v363 = vpack.c.b16 %v339, %v327
    %v364 = vpack.c.b16 %v340, %v328
    %v365 = vpack.c.b16 %v341, %v329
    %v366 = vpack.c.b16 %v342, %v330
    %v367 = vpack.c.b16 %v343, %v331
    %v393 = vsel %vm133, %v185, 0
    %395 = vmatprep.subr.bf16.mxu0 %v345
    %396 = vmatpush1.bf16.msra.mxu0 %v344
    %397 = vmatprep.subr.bf16.mxu0 %v357
    %398 = vmatpush1.bf16.msra.mxu0 %v356
    %399 = vmatprep.subr.bf16.mxu0 0
    %400 = vmatpush1.bf16.msra.mxu0 0
    %401 = vmatprep.subr.bf16.mxu0 0
    %402 = vmatpush1.bf16.msra.mxu0 0
    %403 = vmatprep.subr.bf16.mxu0 0
    %404 = vmatpush1.bf16.msra.mxu0 0
    %405 = vmatprep.subr.bf16.mxu0 0
    %406 = vmatpush1.bf16.msra.mxu0 0
    %407 = vmatprep.subr.bf16.mxu0 0
    %408 = vmatpush1.bf16.msra.mxu0 0
    %409 = vmatprep.subr.bf16.mxu0 0
    %410 = vmatpush1.bf16.msra.mxu0 0
    %411 = vmatprep.subr.bf16.mxu0 0
    %412 = vmatpush1.bf16.msra.mxu0 0
    %413 = vmatprep.subr.bf16.mxu0 0
    %414 = vmatpush1.bf16.msra.mxu0 0
    %415 = vmatprep.subr.bf16.mxu0 0
    %416 = vmatpush1.bf16.msra.mxu0 0
    %417 = vmatprep.subr.bf16.mxu0 0
    %418 = vmatpush1.bf16.msra.mxu0 0
    %419 = vmatprep.subr.bf16.mxu0 0
    %420 = vmatpush1.bf16.msra.mxu0 0
    %421 = vmatprep.subr.bf16.mxu0 0
    %422 = vmatpush1.bf16.msra.mxu0 0
    %423 = vmatprep.subr.bf16.mxu0 0
    %424 = vmatpush1.bf16.msra.mxu0 0
    %425 = vmatprep.subr.bf16.mxu0 0
    %426 = vmatpush1.bf16.msra.mxu0 0
    %427 = vmatprep.mubr.bf16.mxu0 0
    %428 = vmatmul.mubr.bf16.gmra.mrb[0].mxu0 %v393
    %v429 = vpop.f32.mrb[0].mxu0
    %v430 = vadd.f32 %v215, %v429
    %v431 = vpop.f32.mrb[0].mxu0
    %v432 = vadd.f32 %v219, %v431
    %v433 = vpop.f32.mrb[0].mxu0
    %v434 = vpop.f32.mrb[0].mxu0
    %435 = vdwg.mxu0
    %436 = vmatprep.subr.bf16.mxu0 %v347
    %437 = vmatpush1.bf16.msra.mxu0 %v346
    %438 = vmatprep.subr.bf16.mxu0 %v359
    %439 = vmatpush1.bf16.msra.mxu0 %v358
    %440 = vmatprep.subr.bf16.mxu0 0
    %441 = vmatpush1.bf16.msra.mxu0 0
    %442 = vmatprep.subr.bf16.mxu0 0
    %443 = vmatpush1.bf16.msra.mxu0 0
    %444 = vmatprep.subr.bf16.mxu0 0
    %445 = vmatpush1.bf16.msra.mxu0 0
    %446 = vmatprep.subr.bf16.mxu0 0
    %447 = vmatpush1.bf16.msra.mxu0 0
    %448 = vmatprep.subr.bf16.mxu0 0
    %449 = vmatpush1.bf16.msra.mxu0 0
    %450 = vmatprep.subr.bf16.mxu0 0
    %451 = vmatpush1.bf16.msra.mxu0 0
    %452 = vmatprep.subr.bf16.mxu0 0
    %453 = vmatpush1.bf16.msra.mxu0 0
    %454 = vmatprep.subr.bf16.mxu0 0
    %455 = vmatpush1.bf16.msra.mxu0 0
    %456 = vmatprep.subr.bf16.mxu0 0
    %457 = vmatpush1.bf16.msra.mxu0 0
    %458 = vmatprep.subr.bf16.mxu0 0
    %459 = vmatpush1.bf16.msra.mxu0 0
    %460 = vmatprep.subr.bf16.mxu0 0
    %461 = vmatpush1.bf16.msra.mxu0 0
    %462 = vmatprep.subr.bf16.mxu0 0
    %463 = vmatpush1.bf16.msra.mxu0 0
    %464 = vmatprep.subr.bf16.mxu0 0
    %465 = vmatpush1.bf16.msra.mxu0 0
    %466 = vmatprep.subr.bf16.mxu0 0
    %467 = vmatpush1.bf16.msra.mxu0 0
    %468 = vmatprep.mubr.bf16.mxu0 0
    %469 = vmatmul.mubr.bf16.gmra.mrb[0].mxu0 %v393
    %v470 = vpop.f32.mrb[0].mxu0
    %v471 = vadd.f32 %v223, %v470
    %v472 = vpop.f32.mrb[0].mxu0
    %v473 = vadd.f32 %v227, %v472
    %v474 = vpop.f32.mrb[0].mxu0
    %v475 = vpop.f32.mrb[0].mxu0
    %476 = vdwg.mxu0
    %477 = vmatprep.subr.bf16.mxu0 %v349
    %478 = vmatpush1.bf16.msra.mxu0 %v348
    %479 = vmatprep.subr.bf16.mxu0 %v361
    %480 = vmatpush1.bf16.msra.mxu0 %v360
    %481 = vmatprep.subr.bf16.mxu0 0
    %482 = vmatpush1.bf16.msra.mxu0 0
    %483 = vmatprep.subr.bf16.mxu0 0
    %484 = vmatpush1.bf16.msra.mxu0 0
    %485 = vmatprep.subr.bf16.mxu0 0
    %486 = vmatpush1.bf16.msra.mxu0 0
    %487 = vmatprep.subr.bf16.mxu0 0
    %488 = vmatpush1.bf16.msra.mxu0 0
    %489 = vmatprep.subr.bf16.mxu0 0
    %490 = vmatpush1.bf16.msra.mxu0 0
    %491 = vmatprep.subr.bf16.mxu0 0
    %492 = vmatpush1.bf16.msra.mxu0 0
    %493 = vmatprep.subr.bf16.mxu0 0
    %494 = vmatpush1.bf16.msra.mxu0 0
    %495 = vmatprep.subr.bf16.mxu0 0
    %496 = vmatpush1.bf16.msra.mxu0 0
    %497 = vmatprep.subr.bf16.mxu0 0
    %498 = vmatpush1.bf16.msra.mxu0 0
    %499 = vmatprep.subr.bf16.mxu0 0
    %500 = vmatpush1.bf16.msra.mxu0 0
    %501 = vmatprep.subr.bf16.mxu0 0
    %502 = vmatpush1.bf16.msra.mxu0 0
    %503 = vmatprep.subr.bf16.mxu0 0
    %504 = vmatpush1.bf16.msra.mxu0 0
    %505 = vmatprep.subr.bf16.mxu0 0
    %506 = vmatpush1.bf16.msra.mxu0 0
    %507 = vmatprep.subr.bf16.mxu0 0
    %508 = vmatpush1.bf16.msra.mxu0 0
    %509 = vmatprep.mubr.bf16.mxu0 0
    %510 = vmatmul.mubr.bf16.gmra.mrb[0].mxu0 %v393
    %v511 = vpop.f32.mrb[0].mxu0
    %v512 = vadd.f32 %v231, %v511
    %v513 = vpop.f32.mrb[0].mxu0
    %v514 = vadd.f32 %v235, %v513
    %v515 = vpop.f32.mrb[0].mxu0
    %v516 = vpop.f32.mrb[0].mxu0
    %517 = vdwg.mxu0
    %518 = vmatprep.subr.bf16.mxu0 %v351
    %519 = vmatpush1.bf16.msra.mxu0 %v350
    %520 = vmatprep.subr.bf16.mxu0 %v363
    %521 = vmatpush1.bf16.msra.mxu0 %v362
    %522 = vmatprep.subr.bf16.mxu0 0
    %523 = vmatpush1.bf16.msra.mxu0 0
    %524 = vmatprep.subr.bf16.mxu0 0
    %525 = vmatpush1.bf16.msra.mxu0 0
    %526 = vmatprep.subr.bf16.mxu0 0
    %527 = vmatpush1.bf16.msra.mxu0 0
    %528 = vmatprep.subr.bf16.mxu0 0
    %529 = vmatpush1.bf16.msra.mxu0 0
    %530 = vmatprep.subr.bf16.mxu0 0
    %531 = vmatpush1.bf16.msra.mxu0 0
    %532 = vmatprep.subr.bf16.mxu0 0
    %533 = vmatpush1.bf16.msra.mxu0 0
    %534 = vmatprep.subr.bf16.mxu0 0
    %535 = vmatpush1.bf16.msra.mxu0 0
    %536 = vmatprep.subr.bf16.mxu0 0
    %537 = vmatpush1.bf16.msra.mxu0 0
    %538 = vmatprep.subr.bf16.mxu0 0
    %539 = vmatpush1.bf16.msra.mxu0 0
    %540 = vmatprep.subr.bf16.mxu0 0
    %541 = vmatpush1.bf16.msra.mxu0 0
    %542 = vmatprep.subr.bf16.mxu0 0
    %543 = vmatpush1.bf16.msra.mxu0 0
    %544 = vmatprep.subr.bf16.mxu0 0
    %545 = vmatpush1.bf16.msra.mxu0 0
    %546 = vmatprep.subr.bf16.mxu0 0
    %547 = vmatpush1.bf16.msra.mxu0 0
    %548 = vmatprep.subr.bf16.mxu0 0
    %549 = vmatpush1.bf16.msra.mxu0 0
    %550 = vmatprep.mubr.bf16.mxu0 0
    %551 = vmatmul.mubr.bf16.gmra.mrb[0].mxu0 %v393
    %v552 = vpop.f32.mrb[0].mxu0
    %v553 = vadd.f32 %v239, %v552
    %v554 = vpop.f32.mrb[0].mxu0
    %v555 = vadd.f32 %v243, %v554
    %v556 = vpop.f32.mrb[0].mxu0
    %v557 = vpop.f32.mrb[0].mxu0
    %558 = vdwg.mxu0
    %559 = vmatprep.subr.bf16.mxu0 %v353
    %560 = vmatpush1.bf16.msra.mxu0 %v352
    %561 = vmatprep.subr.bf16.mxu0 %v365
    %562 = vmatpush1.bf16.msra.mxu0 %v364
    %563 = vmatprep.subr.bf16.mxu0 0
    %564 = vmatpush1.bf16.msra.mxu0 0
    %565 = vmatprep.subr.bf16.mxu0 0
    %566 = vmatpush1.bf16.msra.mxu0 0
    %567 = vmatprep.subr.bf16.mxu0 0
    %568 = vmatpush1.bf16.msra.mxu0 0
    %569 = vmatprep.subr.bf16.mxu0 0
    %570 = vmatpush1.bf16.msra.mxu0 0
    %571 = vmatprep.subr.bf16.mxu0 0
    %572 = vmatpush1.bf16.msra.mxu0 0
    %573 = vmatprep.subr.bf16.mxu0 0
    %574 = vmatpush1.bf16.msra.mxu0 0
    %575 = vmatprep.subr.bf16.mxu0 0
    %576 = vmatpush1.bf16.msra.mxu0 0
    %577 = vmatprep.subr.bf16.mxu0 0
    %578 = vmatpush1.bf16.msra.mxu0 0
    %579 = vmatprep.subr.bf16.mxu0 0
    %580 = vmatpush1.bf16.msra.mxu0 0
    %581 = vmatprep.subr.bf16.mxu0 0
    %582 = vmatpush1.bf16.msra.mxu0 0
    %583 = vmatprep.subr.bf16.mxu0 0
    %584 = vmatpush1.bf16.msra.mxu0 0
    %585 = vmatprep.subr.bf16.mxu0 0
    %586 = vmatpush1.bf16.msra.mxu0 0
    %587 = vmatprep.subr.bf16.mxu0 0
    %588 = vmatpush1.bf16.msra.mxu0 0
    %589 = vmatprep.subr.bf16.mxu0 0
    %590 = vmatpush1.bf16.msra.mxu0 0
    %591 = vmatprep.mubr.bf16.mxu0 0
    %592 = vmatmul.mubr.bf16.gmra.mrb[0].mxu0 %v393
    %v593 = vpop.f32.mrb[0].mxu0
    %v594 = vadd.f32 %v247, %v593
    %v595 = vpop.f32.mrb[0].mxu0
    %v596 = vadd.f32 %v251, %v595
    %v597 = vpop.f32.mrb[0].mxu0
    %v598 = vpop.f32.mrb[0].mxu0
    %599 = vdwg.mxu0
    %600 = vmatprep.subr.bf16.mxu0 %v355
    %601 = vmatpush1.bf16.msra.mxu0 %v354
    %602 = vmatprep.subr.bf16.mxu0 %v367
    %603 = vmatpush1.bf16.msra.mxu0 %v366
    %604 = vmatprep.subr.bf16.mxu0 0
    %605 = vmatpush1.bf16.msra.mxu0 0
    %606 = vmatprep.subr.bf16.mxu0 0
    %607 = vmatpush1.bf16.msra.mxu0 0
    %608 = vmatprep.subr.bf16.mxu0 0
    %609 = vmatpush1.bf16.msra.mxu0 0
    %610 = vmatprep.subr.bf16.mxu0 0
    %611 = vmatpush1.bf16.msra.mxu0 0
    %612 = vmatprep.subr.bf16.mxu0 0
    %613 = vmatpush1.bf16.msra.mxu0 0
    %614 = vmatprep.subr.bf16.mxu0 0
    %615 = vmatpush1.bf16.msra.mxu0 0
    %616 = vmatprep.subr.bf16.mxu0 0
    %617 = vmatpush1.bf16.msra.mxu0 0
    %618 = vmatprep.subr.bf16.mxu0 0
    %619 = vmatpush1.bf16.msra.mxu0 0
    %620 = vmatprep.subr.bf16.mxu0 0
    %621 = vmatpush1.bf16.msra.mxu0 0
    %622 = vmatprep.subr.bf16.mxu0 0
    %623 = vmatpush1.bf16.msra.mxu0 0
    %624 = vmatprep.subr.bf16.mxu0 0
    %625 = vmatpush1.bf16.msra.mxu0 0
    %626 = vmatprep.subr.bf16.mxu0 0
    %627 = vmatpush1.bf16.msra.mxu0 0
    %628 = vmatprep.subr.bf16.mxu0 0
    %629 = vmatpush1.bf16.msra.mxu0 0
    %630 = vmatprep.subr.bf16.mxu0 0
    %631 = vmatpush1.bf16.msra.mxu0 0
    %632 = vmatprep.mubr.bf16.mxu0 0
    %633 = vmatmul.mubr.bf16.gmra.mrb[0].mxu0 %v393
    %v634 = vpop.f32.mrb[0].mxu0
    %v635 = vadd.f32 %v255, %v634
    %v636 = vpop.f32.mrb[0].mxu0
    %v637 = vadd.f32 %v259, %v636
    %v638 = vpop.f32.mrb[0].mxu0
    %v639 = vpop.f32.mrb[0].mxu0
    %640 = vdwg.mxu0
    %v641 = vmax.f32 %v430, 0.0
    %v642 = vmax.f32 %v432, 0.0
    %v643 = vmax.f32 %v471, 0.0
    %v644 = vmax.f32 %v473, 0.0
    %v645 = vmax.f32 %v512, 0.0
    %v646 = vmax.f32 %v514, 0.0
    %v647 = vmax.f32 %v553, 0.0
    %v648 = vmax.f32 %v555, 0.0
    %v649 = vmax.f32 %v594, 0.0
    %v650 = vmax.f32 %v596, 0.0
    %v651 = vmax.f32 %v635, 0.0
    %v652 = vmax.f32 %v637, 0.0
    %v653 = vpack.c.bf16 %v641, %v641
    %v654 = vpack.c.bf16 %v642, %v642
    %v655 = vpack.c.bf16 %v643, %v643
    %v656 = vpack.c.bf16 %v644, %v644
    %v657 = vpack.c.bf16 %v645, %v645
    %v658 = vpack.c.bf16 %v646, %v646
    %v659 = vpack.c.bf16 %v647, %v647
    %v660 = vpack.c.bf16 %v648, %v648
    %v661 = vpack.c.bf16 %v649, %v649
    %v662 = vpack.c.bf16 %v650, %v650
    %v663 = vpack.c.bf16 %v651, %v651
    %v664 = vpack.c.bf16 %v652, %v652
    %v665 = vld [vmem:[%s3] sm:$0xf]
    %v666 = vld [vmem:[%s3 + $0x4] sm:$0xf]
    %v667 = vld [vmem:[%s3 + $0x8] sm:$0xf]
    %v668 = vld [vmem:[%s3 + $0xc] sm:$0xf]
    %v669 = vld [vmem:[%s3 + $0x10] sm:$0xf]
    %v670 = vld [vmem:[%s3 + $0x14] sm:$0xf]
    %v671 = vld [vmem:[%s3 + $0x18] sm:$0xf]
    %v672 = vld [vmem:[%s3 + $0x1c] sm:$0xf]
    %v673 = vld [vmem:[%s3 + $0x20] sm:$0xf]
    %v674 = vld [vmem:[%s3 + $0x24] sm:$0xf]
    %v675 = vld [vmem:[%s3 + $0x28] sm:$0xf]
    %v676 = vld [vmem:[%s3 + $0x2c] sm:$0xf]
    %v677 = vld [vmem:[%s3 + $0x30] sm:$0xf]
    %v678 = vld [vmem:[%s3 + $0x34] sm:$0xf]
    %v679 = vld [vmem:[%s3 + $0x38] sm:$0xf]
    %v680 = vld [vmem:[%s3 + $0x3c] sm:$0xf]
    %v681 = vld [vmem:[%s3 + $0x40] sm:$0xf]
    %v682 = vld [vmem:[%s3 + $0x44] sm:$0xf]
    %v683 = vld [vmem:[%s3 + $0x48] sm:$0xf]
    %v684 = vld [vmem:[%s3 + $0x4c] sm:$0xf]
    %v685 = vld [vmem:[%s3 + $0x50] sm:$0xf]
    %v686 = vld [vmem:[%s3 + $0x54] sm:$0xf]
    %v687 = vld [vmem:[%s3 + $0x58] sm:$0xf]
    %v688 = vld [vmem:[%s3 + $0x5c] sm:$0xf]
    %v689 = vld [vmem:[%s3 + $0x60] sm:$0xf]
    %v690 = vld [vmem:[%s3 + $0x64] sm:$0xf]
    %v691 = vld [vmem:[%s3 + $0x68] sm:$0xf]
    %v692 = vld [vmem:[%s3 + $0x6c] sm:$0xf]
    %v693 = vld [vmem:[%s3 + $0x70] sm:$0xf]
    %v694 = vld [vmem:[%s3 + $0x74] sm:$0xf]
    %v695 = vld [vmem:[%s3 + $0x78] sm:$0xf]
    %v696 = vld [vmem:[%s3 + $0x7c] sm:$0xf]
    %v697 = vld [vmem:[%s3 + $0x80] sm:$0xf]
    %v698 = vld [vmem:[%s3 + $0x84] sm:$0xf]
    %v699 = vld [vmem:[%s3 + $0x88] sm:$0xf]
    %v700 = vld [vmem:[%s3 + $0x8c] sm:$0xf]
    %v701 = vld [vmem:[%s3 + $0x90] sm:$0xf]
    %v702 = vld [vmem:[%s3 + $0x94] sm:$0xf]
    %v703 = vld [vmem:[%s3 + $0x98] sm:$0xf]
    %v704 = vld [vmem:[%s3 + $0x9c] sm:$0xf]
    %v705 = vld [vmem:[%s3 + $0xa0] sm:$0xf]
    %v706 = vld [vmem:[%s3 + $0xa4] sm:$0xf]
    %v707 = vld [vmem:[%s3 + $0xa8] sm:$0xf]
    %v708 = vld [vmem:[%s3 + $0xac] sm:$0xf]
    %v709 = vld [vmem:[%s3 + $0xb0] sm:$0xf]
    %v710 = vld [vmem:[%s3 + $0xb4] sm:$0xf]
    %v711 = vld [vmem:[%s3 + $0xb8] sm:$0xf]
    %v712 = vld [vmem:[%s3 + $0xbc] sm:$0xf]
    %v713 = vld [vmem:[%s3 + $0xc0] sm:$0xf]
    %v714 = vld [vmem:[%s3 + $0xc4] sm:$0xf]
    %v715 = vld [vmem:[%s3 + $0xc8] sm:$0xf]
    %v716 = vld [vmem:[%s3 + $0xcc] sm:$0xf]
    %v717 = vld [vmem:[%s3 + $0xd0] sm:$0xf]
    %v718 = vld [vmem:[%s3 + $0xd4] sm:$0xf]
    %v719 = vld [vmem:[%s3 + $0xd8] sm:$0xf]
    %v720 = vld [vmem:[%s3 + $0xdc] sm:$0xf]
    %v721 = vld [vmem:[%s3 + $0xe0] sm:$0xf]
    %v722 = vld [vmem:[%s3 + $0xe4] sm:$0xf]
    %v723 = vld [vmem:[%s3 + $0xe8] sm:$0xf]
    %v724 = vld [vmem:[%s3 + $0xec] sm:$0xf]
    %v725 = vld [vmem:[%s3 + $0xf0] sm:$0xf]
    %v726 = vld [vmem:[%s3 + $0xf4] sm:$0xf]
    %v727 = vld [vmem:[%s3 + $0xf8] sm:$0xf]
    %v728 = vld [vmem:[%s3 + $0xfc] sm:$0xf]
    %v729 = vld [vmem:[%s3 + $0x100] sm:$0xf]
    %v730 = vld [vmem:[%s3 + $0x104] sm:$0xf]
    %v731 = vld [vmem:[%s3 + $0x108] sm:$0xf]
    %v732 = vld [vmem:[%s3 + $0x10c] sm:$0xf]
    %v733 = vld [vmem:[%s3 + $0x110] sm:$0xf]
    %v734 = vld [vmem:[%s3 + $0x114] sm:$0xf]
    %v735 = vld [vmem:[%s3 + $0x118] sm:$0xf]
    %v736 = vld [vmem:[%s3 + $0x11c] sm:$0xf]
    %v737 = vld [vmem:[%s3 + $0x120] sm:$0xf]
    %v738 = vld [vmem:[%s3 + $0x124] sm:$0xf]
    %v739 = vld [vmem:[%s3 + $0x128] sm:$0xf]
    %v740 = vld [vmem:[%s3 + $0x12c] sm:$0xf]
    %v741 = vld [vmem:[%s3 + $0x130] sm:$0xf]
    %v742 = vld [vmem:[%s3 + $0x134] sm:$0xf]
    %v743 = vld [vmem:[%s3 + $0x138] sm:$0xf]
    %v744 = vld [vmem:[%s3 + $0x13c] sm:$0xf]
    %v745 = vld [vmem:[%s3 + $0x140] sm:$0xf]
    %v746 = vld [vmem:[%s3 + $0x144] sm:$0xf]
    %v747 = vld [vmem:[%s3 + $0x148] sm:$0xf]
    %v748 = vld [vmem:[%s3 + $0x14c] sm:$0xf]
    %v749 = vld [vmem:[%s3 + $0x150] sm:$0xf]
    %v750 = vld [vmem:[%s3 + $0x154] sm:$0xf]
    %v751 = vld [vmem:[%s3 + $0x158] sm:$0xf]
    %v752 = vld [vmem:[%s3 + $0x15c] sm:$0xf]
    %v753 = vld [vmem:[%s3 + $0x160] sm:$0xf]
    %v754 = vld [vmem:[%s3 + $0x164] sm:$0xf]
    %v755 = vld [vmem:[%s3 + $0x168] sm:$0xf]
    %v756 = vld [vmem:[%s3 + $0x16c] sm:$0xf]
    %v757 = vld [vmem:[%s3 + $0x170] sm:$0xf]
    %v758 = vld [vmem:[%s3 + $0x174] sm:$0xf]
    %v759 = vld [vmem:[%s3 + $0x178] sm:$0xf]
    %v760 = vld [vmem:[%s3 + $0x17c] sm:$0xf]
    %v761 = vld [vmem:[%s3 + $0x180] sm:$0xf]
    %v762 = vld [vmem:[%s3 + $0x184] sm:$0xf]
    %v763 = vld [vmem:[%s3 + $0x188] sm:$0xf]
    %v764 = vld [vmem:[%s3 + $0x18c] sm:$0xf]
    %v765 = vld [vmem:[%s3 + $0x190] sm:$0xf]
    %v766 = vld [vmem:[%s3 + $0x194] sm:$0xf]
    %v767 = vld [vmem:[%s3 + $0x198] sm:$0xf]
    %v768 = vld [vmem:[%s3 + $0x19c] sm:$0xf]
    %v769 = vld [vmem:[%s3 + $0x1a0] sm:$0xf]
    %v770 = vld [vmem:[%s3 + $0x1a4] sm:$0xf]
    %v771 = vld [vmem:[%s3 + $0x1a8] sm:$0xf]
    %v772 = vld [vmem:[%s3 + $0x1ac] sm:$0xf]
    %v773 = vld [vmem:[%s3 + $0x1b0] sm:$0xf]
    %v774 = vld [vmem:[%s3 + $0x1b4] sm:$0xf]
    %v775 = vld [vmem:[%s3 + $0x1b8] sm:$0xf]
    %v776 = vld [vmem:[%s3 + $0x1bc] sm:$0xf]
    %v777 = vld [vmem:[%s3 + $0x1c0] sm:$0xf]
    %v778 = vld [vmem:[%s3 + $0x1c4] sm:$0xf]
    %v779 = vld [vmem:[%s3 + $0x1c8] sm:$0xf]
    %v780 = vld [vmem:[%s3 + $0x1cc] sm:$0xf]
    %v781 = vld [vmem:[%s3 + $0x1d0] sm:$0xf]
    %v782 = vld [vmem:[%s3 + $0x1d4] sm:$0xf]
    %v783 = vld [vmem:[%s3 + $0x1d8] sm:$0xf]
    %v784 = vld [vmem:[%s3 + $0x1dc] sm:$0xf]
    %v785 = vld [vmem:[%s3 + $0x1e0] sm:$0xf]
    %v786 = vld [vmem:[%s3 + $0x1e4] sm:$0xf]
    %v787 = vld [vmem:[%s3 + $0x1e8] sm:$0xf]
    %v788 = vld [vmem:[%s3 + $0x1ec] sm:$0xf]
    %v789 = vld [vmem:[%s3 + $0x1f0] sm:$0xf]
    %v790 = vld [vmem:[%s3 + $0x1f4] sm:$0xf]
    %v791 = vld [vmem:[%s3 + $0x1f8] sm:$0xf]
    %v792 = vld [vmem:[%s3 + $0x1fc] sm:$0xf]
    %v793 = vld [vmem:[%s3 + $0x200] sm:$0xf]
    %v794 = vld [vmem:[%s3 + $0x204] sm:$0xf]
    %v795 = vld [vmem:[%s3 + $0x208] sm:$0xf]
    %v796 = vld [vmem:[%s3 + $0x20c] sm:$0xf]
    %v797 = vld [vmem:[%s3 + $0x210] sm:$0xf]
    %v798 = vld [vmem:[%s3 + $0x214] sm:$0xf]
    %v799 = vld [vmem:[%s3 + $0x218] sm:$0xf]
    %v800 = vld [vmem:[%s3 + $0x21c] sm:$0xf]
    %v801 = vld [vmem:[%s3 + $0x220] sm:$0xf]
    %v802 = vld [vmem:[%s3 + $0x224] sm:$0xf]
    %v803 = vld [vmem:[%s3 + $0x228] sm:$0xf]
    %v804 = vld [vmem:[%s3 + $0x22c] sm:$0xf]
    %v805 = vld [vmem:[%s3 + $0x230] sm:$0xf]
    %v806 = vld [vmem:[%s3 + $0x234] sm:$0xf]
    %v807 = vld [vmem:[%s3 + $0x238] sm:$0xf]
    %v808 = vld [vmem:[%s3 + $0x23c] sm:$0xf]
    %v809 = vld [vmem:[%s3 + $0x240] sm:$0xf]
    %v810 = vld [vmem:[%s3 + $0x244] sm:$0xf]
    %v811 = vld [vmem:[%s3 + $0x248] sm:$0xf]
    %v812 = vld [vmem:[%s3 + $0x24c] sm:$0xf]
    %v813 = vld [vmem:[%s3 + $0x250] sm:$0xf]
    %v814 = vld [vmem:[%s3 + $0x254] sm:$0xf]
    %v815 = vld [vmem:[%s3 + $0x258] sm:$0xf]
    %v816 = vld [vmem:[%s3 + $0x25c] sm:$0xf]
    %v817 = vld [vmem:[%s3 + $0x260] sm:$0xf]
    %v818 = vld [vmem:[%s3 + $0x264] sm:$0xf]
    %v819 = vld [vmem:[%s3 + $0x268] sm:$0xf]
    %v820 = vld [vmem:[%s3 + $0x26c] sm:$0xf]
    %v821 = vld [vmem:[%s3 + $0x270] sm:$0xf]
    %v822 = vld [vmem:[%s3 + $0x274] sm:$0xf]
    %v823 = vld [vmem:[%s3 + $0x278] sm:$0xf]
    %v824 = vld [vmem:[%s3 + $0x27c] sm:$0xf]
    %v825 = vld [vmem:[%s3 + $0x280] sm:$0xf]
    %v826 = vld [vmem:[%s3 + $0x284] sm:$0xf]
    %v827 = vld [vmem:[%s3 + $0x288] sm:$0xf]
    %v828 = vld [vmem:[%s3 + $0x28c] sm:$0xf]
    %v829 = vld [vmem:[%s3 + $0x290] sm:$0xf]
    %v830 = vld [vmem:[%s3 + $0x294] sm:$0xf]
    %v831 = vld [vmem:[%s3 + $0x298] sm:$0xf]
    %v832 = vld [vmem:[%s3 + $0x29c] sm:$0xf]
    %v833 = vld [vmem:[%s3 + $0x2a0] sm:$0xf]
    %v834 = vld [vmem:[%s3 + $0x2a4] sm:$0xf]
    %v835 = vld [vmem:[%s3 + $0x2a8] sm:$0xf]
    %v836 = vld [vmem:[%s3 + $0x2ac] sm:$0xf]
    %v837 = vld [vmem:[%s3 + $0x2b0] sm:$0xf]
    %v838 = vld [vmem:[%s3 + $0x2b4] sm:$0xf]
    %v839 = vld [vmem:[%s3 + $0x2b8] sm:$0xf]
    %v840 = vld [vmem:[%s3 + $0x2bc] sm:$0xf]
    %v841 = vld [vmem:[%s3 + $0x2c0] sm:$0xf]
    %v842 = vld [vmem:[%s3 + $0x2c4] sm:$0xf]
    %v843 = vld [vmem:[%s3 + $0x2c8] sm:$0xf]
    %v844 = vld [vmem:[%s3 + $0x2cc] sm:$0xf]
    %v845 = vld [vmem:[%s3 + $0x2d0] sm:$0xf]
    %v846 = vld [vmem:[%s3 + $0x2d4] sm:$0xf]
    %v847 = vld [vmem:[%s3 + $0x2d8] sm:$0xf]
    %v848 = vld [vmem:[%s3 + $0x2dc] sm:$0xf]
    %v849 = vld [vmem:[%s3 + $0x2e0] sm:$0xf]
    %v850 = vld [vmem:[%s3 + $0x2e4] sm:$0xf]
    %v851 = vld [vmem:[%s3 + $0x2e8] sm:$0xf]
    %v852 = vld [vmem:[%s3 + $0x2ec] sm:$0xf]
    %v853 = vld [vmem:[%s3 + $0x2f0] sm:$0xf]
    %v854 = vld [vmem:[%s3 + $0x2f4] sm:$0xf]
    %v855 = vld [vmem:[%s3 + $0x2f8] sm:$0xf]
    %v856 = vld [vmem:[%s3 + $0x2fc] sm:$0xf]
    %v857 = vlaneseq
    %v858 = vshrl.u32 %v857, 7
    %v859 = vsub.s32 0, %v858
    %v860 = vrot.slane %v42, %v859
    %v1053 = vunpack.c.l.b16 %v665
    %v1054 = vunpack.c.l.b16 %v666
    %v1055 = vunpack.c.l.b16 %v667
    %v1056 = vunpack.c.l.b16 %v668
    %v1057 = vunpack.c.l.b16 %v669
    %v1058 = vunpack.c.l.b16 %v670
    %v1059 = vunpack.c.l.b16 %v671
    %v1060 = vunpack.c.l.b16 %v672
    %v1061 = vunpack.c.l.b16 %v673
    %v1062 = vunpack.c.l.b16 %v674
    %v1063 = vunpack.c.l.b16 %v675
    %v1064 = vunpack.c.l.b16 %v676
    %v1065 = vunpack.c.l.b16 %v677
    %v1066 = vunpack.c.l.b16 %v678
    %v1067 = vunpack.c.l.b16 %v679
    %v1068 = vunpack.c.l.b16 %v680
    %v1069 = vunpack.c.l.b16 %v681
    %v1070 = vunpack.c.l.b16 %v682
    %v1071 = vunpack.c.l.b16 %v683
    %v1072 = vunpack.c.l.b16 %v684
    %v1073 = vunpack.c.l.b16 %v685
    %v1074 = vunpack.c.l.b16 %v686
    %v1075 = vunpack.c.l.b16 %v687
    %v1076 = vunpack.c.l.b16 %v688
    %v1077 = vunpack.c.l.b16 %v689
    %v1078 = vunpack.c.l.b16 %v690
    %v1079 = vunpack.c.l.b16 %v691
    %v1080 = vunpack.c.l.b16 %v692
    %v1081 = vunpack.c.l.b16 %v693
    %v1082 = vunpack.c.l.b16 %v694
    %v1083 = vunpack.c.l.b16 %v695
    %v1084 = vunpack.c.l.b16 %v696
    %v1085 = vunpack.c.l.b16 %v697
    %v1086 = vunpack.c.l.b16 %v698
    %v1087 = vunpack.c.l.b16 %v699
    %v1088 = vunpack.c.l.b16 %v700
    %v1089 = vunpack.c.l.b16 %v701
    %v1090 = vunpack.c.l.b16 %v702
    %v1091 = vunpack.c.l.b16 %v703
    %v1092 = vunpack.c.l.b16 %v704
    %v1093 = vunpack.c.l.b16 %v705
    %v1094 = vunpack.c.l.b16 %v706
    %v1095 = vunpack.c.l.b16 %v707
    %v1096 = vunpack.c.l.b16 %v708
    %v1097 = vunpack.c.l.b16 %v709
    %v1098 = vunpack.c.l.b16 %v710
    %v1099 = vunpack.c.l.b16 %v711
    %v1100 = vunpack.c.l.b16 %v712
    %v1101 = vunpack.c.l.b16 %v713
    %v1102 = vunpack.c.l.b16 %v714
    %v1103 = vunpack.c.l.b16 %v715
    %v1104 = vunpack.c.l.b16 %v716
    %v1105 = vunpack.c.l.b16 %v717
    %v1106 = vunpack.c.l.b16 %v718
    %v1107 = vunpack.c.l.b16 %v719
    %v1108 = vunpack.c.l.b16 %v720
    %v1109 = vunpack.c.l.b16 %v721
    %v1110 = vunpack.c.l.b16 %v722
    %v1111 = vunpack.c.l.b16 %v723
    %v1112 = vunpack.c.l.b16 %v724
    %v1113 = vunpack.c.l.b16 %v725
    %v1114 = vunpack.c.l.b16 %v726
    %v1115 = vunpack.c.l.b16 %v727
    %v1116 = vunpack.c.l.b16 %v728
    %v1117 = vunpack.c.l.b16 %v729
    %v1118 = vunpack.c.l.b16 %v730
    %v1119 = vunpack.c.l.b16 %v731
    %v1120 = vunpack.c.l.b16 %v732
    %v1121 = vunpack.c.l.b16 %v733
    %v1122 = vunpack.c.l.b16 %v734
    %v1123 = vunpack.c.l.b16 %v735
    %v1124 = vunpack.c.l.b16 %v736
    %v1125 = vunpack.c.l.b16 %v737
    %v1126 = vunpack.c.l.b16 %v738
    %v1127 = vunpack.c.l.b16 %v739
    %v1128 = vunpack.c.l.b16 %v740
    %v1129 = vunpack.c.l.b16 %v741
    %v1130 = vunpack.c.l.b16 %v742
    %v1131 = vunpack.c.l.b16 %v743
    %v1132 = vunpack.c.l.b16 %v744
    %v1133 = vunpack.c.l.b16 %v745
    %v1134 = vunpack.c.l.b16 %v746
    %v1135 = vunpack.c.l.b16 %v747
    %v1136 = vunpack.c.l.b16 %v748
    %v1137 = vunpack.c.l.b16 %v749
    %v1138 = vunpack.c.l.b16 %v750
    %v1139 = vunpack.c.l.b16 %v751
    %v1140 = vunpack.c.l.b16 %v752
    %v1141 = vunpack.c.l.b16 %v753
    %v1142 = vunpack.c.l.b16 %v754
    %v1143 = vunpack.c.l.b16 %v755
    %v1144 = vunpack.c.l.b16 %v756
    %v1145 = vunpack.c.l.b16 %v757
    %v1146 = vunpack.c.l.b16 %v758
    %v1147 = vunpack.c.l.b16 %v759
    %v1148 = vunpack.c.l.b16 %v760
    %v1149 = vunpack.c.l.b16 %v761
    %v1150 = vunpack.c.l.b16 %v762
    %v1151 = vunpack.c.l.b16 %v763
    %v1152 = vunpack.c.l.b16 %v764
    %v1153 = vunpack.c.l.b16 %v765
    %v1154 = vunpack.c.l.b16 %v766
    %v1155 = vunpack.c.l.b16 %v767
    %v1156 = vunpack.c.l.b16 %v768
    %v1157 = vunpack.c.l.b16 %v769
    %v1158 = vunpack.c.l.b16 %v770
    %v1159 = vunpack.c.l.b16 %v771
    %v1160 = vunpack.c.l.b16 %v772
    %v1161 = vunpack.c.l.b16 %v773
    %v1162 = vunpack.c.l.b16 %v774
    %v1163 = vunpack.c.l.b16 %v775
    %v1164 = vunpack.c.l.b16 %v776
    %v1165 = vunpack.c.l.b16 %v777
    %v1166 = vunpack.c.l.b16 %v778
    %v1167 = vunpack.c.l.b16 %v779
    %v1168 = vunpack.c.l.b16 %v780
    %v1169 = vunpack.c.l.b16 %v781
    %v1170 = vunpack.c.l.b16 %v782
    %v1171 = vunpack.c.l.b16 %v783
    %v1172 = vunpack.c.l.b16 %v784
    %v1173 = vunpack.c.l.b16 %v785
    %v1174 = vunpack.c.l.b16 %v786
    %v1175 = vunpack.c.l.b16 %v787
    %v1176 = vunpack.c.l.b16 %v788
    %v1177 = vunpack.c.l.b16 %v789
    %v1178 = vunpack.c.l.b16 %v790
    %v1179 = vunpack.c.l.b16 %v791
    %v1180 = vunpack.c.l.b16 %v792
    %v1181 = vunpack.c.l.b16 %v793
    %v1182 = vunpack.c.l.b16 %v794
    %v1183 = vunpack.c.l.b16 %v795
    %v1184 = vunpack.c.l.b16 %v796
    %v1185 = vunpack.c.l.b16 %v797
    %v1186 = vunpack.c.l.b16 %v798
    %v1187 = vunpack.c.l.b16 %v799
    %v1188 = vunpack.c.l.b16 %v800
    %v1189 = vunpack.c.l.b16 %v801
    %v1190 = vunpack.c.l.b16 %v802
    %v1191 = vunpack.c.l.b16 %v803
    %v1192 = vunpack.c.l.b16 %v804
    %v1193 = vunpack.c.l.b16 %v805
    %v1194 = vunpack.c.l.b16 %v806
    %v1195 = vunpack.c.l.b16 %v807
    %v1196 = vunpack.c.l.b16 %v808
    %v1197 = vunpack.c.l.b16 %v809
    %v1198 = vunpack.c.l.b16 %v810
    %v1199 = vunpack.c.l.b16 %v811
    %v1200 = vunpack.c.l.b16 %v812
    %v1201 = vunpack.c.l.b16 %v813
    %v1202 = vunpack.c.l.b16 %v814
    %v1203 = vunpack.c.l.b16 %v815
    %v1204 = vunpack.c.l.b16 %v816
    %v1205 = vunpack.c.l.b16 %v817
    %v1206 = vunpack.c.l.b16 %v818
    %v1207 = vunpack.c.l.b16 %v819
    %v1208 = vunpack.c.l.b16 %v820
    %v1209 = vunpack.c.l.b16 %v821
    %v1210 = vunpack.c.l.b16 %v822
    %v1211 = vunpack.c.l.b16 %v823
    %v1212 = vunpack.c.l.b16 %v824
    %v1213 = vunpack.c.l.b16 %v825
    %v1214 = vunpack.c.l.b16 %v826
    %v1215 = vunpack.c.l.b16 %v827
    %v1216 = vunpack.c.l.b16 %v828
    %v1217 = vunpack.c.l.b16 %v829
    %v1218 = vunpack.c.l.b16 %v830
    %v1219 = vunpack.c.l.b16 %v831
    %v1220 = vunpack.c.l.b16 %v832
    %v1221 = vunpack.c.l.b16 %v833
    %v1222 = vunpack.c.l.b16 %v834
    %v1223 = vunpack.c.l.b16 %v835
    %v1224 = vunpack.c.l.b16 %v836
    %v1225 = vunpack.c.l.b16 %v837
    %v1226 = vunpack.c.l.b16 %v838
    %v1227 = vunpack.c.l.b16 %v839
    %v1228 = vunpack.c.l.b16 %v840
    %v1229 = vunpack.c.l.b16 %v841
    %v1230 = vunpack.c.l.b16 %v842
    %v1231 = vunpack.c.l.b16 %v843
    %v1232 = vunpack.c.l.b16 %v844
    %v1233 = vunpack.c.l.b16 %v845
    %v1234 = vunpack.c.l.b16 %v846
    %v1235 = vunpack.c.l.b16 %v847
    %v1236 = vunpack.c.l.b16 %v848
    %v1237 = vunpack.c.l.b16 %v849
    %v1238 = vunpack.c.l.b16 %v850
    %v1239 = vunpack.c.l.b16 %v851
    %v1240 = vunpack.c.l.b16 %v852
    %v1241 = vunpack.c.l.b16 %v853
    %v1242 = vunpack.c.l.b16 %v854
    %v1243 = vunpack.c.l.b16 %v855
    %v1244 = vunpack.c.l.b16 %v856
    %v1245 = vpack.c.b16 %v1054, %v1053
    %v1246 = vpack.c.b16 %v1056, %v1055
    %v1247 = vpack.c.b16 %v1058, %v1057
    %v1248 = vpack.c.b16 %v1060, %v1059
    %v1249 = vpack.c.b16 %v1062, %v1061
    %v1250 = vpack.c.b16 %v1064, %v1063
    %v1251 = vpack.c.b16 %v1066, %v1065
    %v1252 = vpack.c.b16 %v1068, %v1067
    %v1253 = vpack.c.b16 %v1070, %v1069
    %v1254 = vpack.c.b16 %v1072, %v1071
    %v1255 = vpack.c.b16 %v1074, %v1073
    %v1256 = vpack.c.b16 %v1076, %v1075
    %v1257 = vpack.c.b16 %v1078, %v1077
    %v1258 = vpack.c.b16 %v1080, %v1079
    %v1259 = vpack.c.b16 %v1082, %v1081
    %v1260 = vpack.c.b16 %v1084, %v1083
    %v1261 = vpack.c.b16 %v1086, %v1085
    %v1262 = vpack.c.b16 %v1088, %v1087
    %v1263 = vpack.c.b16 %v1090, %v1089
    %v1264 = vpack.c.b16 %v1092, %v1091
    %v1265 = vpack.c.b16 %v1094, %v1093
    %v1266 = vpack.c.b16 %v1096, %v1095
    %v1267 = vpack.c.b16 %v1098, %v1097
    %v1268 = vpack.c.b16 %v1100, %v1099
    %v1269 = vpack.c.b16 %v1102, %v1101
    %v1270 = vpack.c.b16 %v1104, %v1103
    %v1271 = vpack.c.b16 %v1106, %v1105
    %v1272 = vpack.c.b16 %v1108, %v1107
    %v1273 = vpack.c.b16 %v1110, %v1109
    %v1274 = vpack.c.b16 %v1112, %v1111
    %v1275 = vpack.c.b16 %v1114, %v1113
    %v1276 = vpack.c.b16 %v1116, %v1115
    %v1277 = vpack.c.b16 %v1118, %v1117
    %v1278 = vpack.c.b16 %v1120, %v1119
    %v1279 = vpack.c.b16 %v1122, %v1121
    %v1280 = vpack.c.b16 %v1124, %v1123
    %v1281 = vpack.c.b16 %v1126, %v1125
    %v1282 = vpack.c.b16 %v1128, %v1127
    %v1283 = vpack.c.b16 %v1130, %v1129
    %v1284 = vpack.c.b16 %v1132, %v1131
    %v1285 = vpack.c.b16 %v1134, %v1133
    %v1286 = vpack.c.b16 %v1136, %v1135
    %v1287 = vpack.c.b16 %v1138, %v1137
    %v1288 = vpack.c.b16 %v1140, %v1139
    %v1289 = vpack.c.b16 %v1142, %v1141
    %v1290 = vpack.c.b16 %v1144, %v1143
    %v1291 = vpack.c.b16 %v1146, %v1145
    %v1292 = vpack.c.b16 %v1148, %v1147
    %v1293 = vpack.c.b16 %v1150, %v1149
    %v1294 = vpack.c.b16 %v1152, %v1151
    %v1295 = vpack.c.b16 %v1154, %v1153
    %v1296 = vpack.c.b16 %v1156, %v1155
    %v1297 = vpack.c.b16 %v1158, %v1157
    %v1298 = vpack.c.b16 %v1160, %v1159
    %v1299 = vpack.c.b16 %v1162, %v1161
    %v1300 = vpack.c.b16 %v1164, %v1163
    %v1301 = vpack.c.b16 %v1166, %v1165
    %v1302 = vpack.c.b16 %v1168, %v1167
    %v1303 = vpack.c.b16 %v1170, %v1169
    %v1304 = vpack.c.b16 %v1172, %v1171
    %v1305 = vpack.c.b16 %v1174, %v1173
    %v1306 = vpack.c.b16 %v1176, %v1175
    %v1307 = vpack.c.b16 %v1178, %v1177
    %v1308 = vpack.c.b16 %v1180, %v1179
    %v1309 = vpack.c.b16 %v1182, %v1181
    %v1310 = vpack.c.b16 %v1184, %v1183
    %v1311 = vpack.c.b16 %v1186, %v1185
    %v1312 = vpack.c.b16 %v1188, %v1187
    %v1313 = vpack.c.b16 %v1190, %v1189
    %v1314 = vpack.c.b16 %v1192, %v1191
    %v1315 = vpack.c.b16 %v1194, %v1193
    %v1316 = vpack.c.b16 %v1196, %v1195
    %v1317 = vpack.c.b16 %v1198, %v1197
    %v1318 = vpack.c.b16 %v1200, %v1199
    %v1319 = vpack.c.b16 %v1202, %v1201
    %v1320 = vpack.c.b16 %v1204, %v1203
    %v1321 = vpack.c.b16 %v1206, %v1205
    %v1322 = vpack.c.b16 %v1208, %v1207
    %v1323 = vpack.c.b16 %v1210, %v1209
    %v1324 = vpack.c.b16 %v1212, %v1211
    %v1325 = vpack.c.b16 %v1214, %v1213
    %v1326 = vpack.c.b16 %v1216, %v1215
    %v1327 = vpack.c.b16 %v1218, %v1217
    %v1328 = vpack.c.b16 %v1220, %v1219
    %v1329 = vpack.c.b16 %v1222, %v1221
    %v1330 = vpack.c.b16 %v1224, %v1223
    %v1331 = vpack.c.b16 %v1226, %v1225
    %v1332 = vpack.c.b16 %v1228, %v1227
    %v1333 = vpack.c.b16 %v1230, %v1229
    %v1334 = vpack.c.b16 %v1232, %v1231
    %v1335 = vpack.c.b16 %v1234, %v1233
    %v1336 = vpack.c.b16 %v1236, %v1235
    %v1337 = vpack.c.b16 %v1238, %v1237
    %v1338 = vpack.c.b16 %v1240, %v1239
    %v1339 = vpack.c.b16 %v1242, %v1241
    %v1340 = vpack.c.b16 %v1244, %v1243
    %1437 = vmatprep.subr.bf16.mxu0 0
    %1438 = vmatpush1.bf16.msra.mxu0 %v1245
    %1439 = vmatprep.subr.bf16.mxu0 0
    %1440 = vmatpush1.bf16.msra.mxu0 %v1246
    %1441 = vmatprep.subr.bf16.mxu0 0
    %1442 = vmatpush1.bf16.msra.mxu0 %v1247
    %1443 = vmatprep.subr.bf16.mxu0 0
    %1444 = vmatpush1.bf16.msra.mxu0 %v1248
    %1445 = vmatprep.subr.bf16.mxu0 0
    %1446 = vmatpush1.bf16.msra.mxu0 %v1249
    %1447 = vmatprep.subr.bf16.mxu0 0
    %1448 = vmatpush1.bf16.msra.mxu0 %v1250
    %1449 = vmatprep.subr.bf16.mxu0 0
    %1450 = vmatpush1.bf16.msra.mxu0 %v1251
    %1451 = vmatprep.subr.bf16.mxu0 0
    %1452 = vmatpush1.bf16.msra.mxu0 %v1252
    %1453 = vmatprep.subr.bf16.mxu0 0
    %1454 = vmatpush1.bf16.msra.mxu0 %v1253
    %1455 = vmatprep.subr.bf16.mxu0 0
    %1456 = vmatpush1.bf16.msra.mxu0 %v1254
    %1457 = vmatprep.subr.bf16.mxu0 0
    %1458 = vmatpush1.bf16.msra.mxu0 %v1255
    %1459 = vmatprep.subr.bf16.mxu0 0
    %1460 = vmatpush1.bf16.msra.mxu0 %v1256
    %1461 = vmatprep.subr.bf16.mxu0 0
    %1462 = vmatpush1.bf16.msra.mxu0 %v1257
    %1463 = vmatprep.subr.bf16.mxu0 0
    %1464 = vmatpush1.bf16.msra.mxu0 %v1258
    %1465 = vmatprep.subr.bf16.mxu0 0
    %1466 = vmatpush1.bf16.msra.mxu0 %v1259
    %1467 = vmatprep.subr.bf16.mxu0 0
    %1468 = vmatpush1.bf16.msra.mxu0 %v1260
    %1469 = vmatprep.mubr.bf16.mxu0 %v654
    %1470 = vmatmul.mubr.bf16.gmra.mrb[0].mxu0 %v653
    %v1471 = vpop.f32.mrb[0].mxu0
    %v1472 = vadd.f32 %v860, %v1471
    %v1473 = vpop.f32.mrb[0].mxu0
    %v1474 = vpop.f32.mrb[0].mxu0
    %v1475 = vpop.f32.mrb[0].mxu0
    %1476 = vdwg.mxu0
    %1477 = vmatprep.subr.bf16.mxu0 0
    %1478 = vmatpush1.bf16.msra.mxu0 %v1261
    %1479 = vmatprep.subr.bf16.mxu0 0
    %1480 = vmatpush1.bf16.msra.mxu0 %v1262
    %1481 = vmatprep.subr.bf16.mxu0 0
    %1482 = vmatpush1.bf16.msra.mxu0 %v1263
    %1483 = vmatprep.subr.bf16.mxu0 0
    %1484 = vmatpush1.bf16.msra.mxu0 %v1264
    %1485 = vmatprep.subr.bf16.mxu0 0
    %1486 = vmatpush1.bf16.msra.mxu0 %v1265
    %1487 = vmatprep.subr.bf16.mxu0 0
    %1488 = vmatpush1.bf16.msra.mxu0 %v1266
    %1489 = vmatprep.subr.bf16.mxu0 0
    %1490 = vmatpush1.bf16.msra.mxu0 %v1267
    %1491 = vmatprep.subr.bf16.mxu0 0
    %1492 = vmatpush1.bf16.msra.mxu0 %v1268
    %1493 = vmatprep.subr.bf16.mxu0 0
    %1494 = vmatpush1.bf16.msra.mxu0 %v1269
    %1495 = vmatprep.subr.bf16.mxu0 0
    %1496 = vmatpush1.bf16.msra.mxu0 %v1270
    %1497 = vmatprep.subr.bf16.mxu0 0
    %1498 = vmatpush1.bf16.msra.mxu0 %v1271
    %1499 = vmatprep.subr.bf16.mxu0 0
    %1500 = vmatpush1.bf16.msra.mxu0 %v1272
    %1501 = vmatprep.subr.bf16.mxu0 0
    %1502 = vmatpush1.bf16.msra.mxu0 %v1273
    %1503 = vmatprep.subr.bf16.mxu0 0
    %1504 = vmatpush1.bf16.msra.mxu0 %v1274
    %1505 = vmatprep.subr.bf16.mxu0 0
    %1506 = vmatpush1.bf16.msra.mxu0 %v1275
    %1507 = vmatprep.subr.bf16.mxu0 0
    %1508 = vmatpush1.bf16.msra.mxu0 %v1276
    %1509 = vmatprep.mubr.bf16.mxu0 %v656
    %1510 = vmatmul.mubr.bf16.gmra.mrb[0].mxu0 %v655
    %v1511 = vpop.f32.mrb[0].mxu0
    %v1512 = vadd.f32 %v1472, %v1511
    %v1513 = vpop.f32.mrb[0].mxu0
    %v1514 = vpop.f32.mrb[0].mxu0
    %v1515 = vpop.f32.mrb[0].mxu0
    %1516 = vdwg.mxu0
    %1517 = vmatprep.subr.bf16.mxu0 0
    %1518 = vmatpush1.bf16.msra.mxu0 %v1277
    %1519 = vmatprep.subr.bf16.mxu0 0
    %1520 = vmatpush1.bf16.msra.mxu0 %v1278
    %1521 = vmatprep.subr.bf16.mxu0 0
    %1522 = vmatpush1.bf16.msra.mxu0 %v1279
    %1523 = vmatprep.subr.bf16.mxu0 0
    %1524 = vmatpush1.bf16.msra.mxu0 %v1280
    %1525 = vmatprep.subr.bf16.mxu0 0
    %1526 = vmatpush1.bf16.msra.mxu0 %v1281
    %1527 = vmatprep.subr.bf16.mxu0 0
    %1528 = vmatpush1.bf16.msra.mxu0 %v1282
    %1529 = vmatprep.subr.bf16.mxu0 0
    %1530 = vmatpush1.bf16.msra.mxu0 %v1283
    %1531 = vmatprep.subr.bf16.mxu0 0
    %1532 = vmatpush1.bf16.msra.mxu0 %v1284
    %1533 = vmatprep.subr.bf16.mxu0 0
    %1534 = vmatpush1.bf16.msra.mxu0 %v1285
    %1535 = vmatprep.subr.bf16.mxu0 0
    %1536 = vmatpush1.bf16.msra.mxu0 %v1286
    %1537 = vmatprep.subr.bf16.mxu0 0
    %1538 = vmatpush1.bf16.msra.mxu0 %v1287
    %1539 = vmatprep.subr.bf16.mxu0 0
    %1540 = vmatpush1.bf16.msra.mxu0 %v1288
    %1541 = vmatprep.subr.bf16.mxu0 0
    %1542 = vmatpush1.bf16.msra.mxu0 %v1289
    %1543 = vmatprep.subr.bf16.mxu0 0
    %1544 = vmatpush1.bf16.msra.mxu0 %v1290
    %1545 = vmatprep.subr.bf16.mxu0 0
    %1546 = vmatpush1.bf16.msra.mxu0 %v1291
    %1547 = vmatprep.subr.bf16.mxu0 0
    %1548 = vmatpush1.bf16.msra.mxu0 %v1292
    %1549 = vmatprep.mubr.bf16.mxu0 %v658
    %1550 = vmatmul.mubr.bf16.gmra.mrb[0].mxu0 %v657
    %v1551 = vpop.f32.mrb[0].mxu0
    %v1552 = vadd.f32 %v1512, %v1551
    %v1553 = vpop.f32.mrb[0].mxu0
    %v1554 = vpop.f32.mrb[0].mxu0
    %v1555 = vpop.f32.mrb[0].mxu0
    %1556 = vdwg.mxu0
    %1557 = vmatprep.subr.bf16.mxu0 0
    %1558 = vmatpush1.bf16.msra.mxu0 %v1293
    %1559 = vmatprep.subr.bf16.mxu0 0
    %1560 = vmatpush1.bf16.msra.mxu0 %v1294
    %1561 = vmatprep.subr.bf16.mxu0 0
    %1562 = vmatpush1.bf16.msra.mxu0 %v1295
    %1563 = vmatprep.subr.bf16.mxu0 0
    %1564 = vmatpush1.bf16.msra.mxu0 %v1296
    %1565 = vmatprep.subr.bf16.mxu0 0
    %1566 = vmatpush1.bf16.msra.mxu0 %v1297
    %1567 = vmatprep.subr.bf16.mxu0 0
    %1568 = vmatpush1.bf16.msra.mxu0 %v1298
    %1569 = vmatprep.subr.bf16.mxu0 0
    %1570 = vmatpush1.bf16.msra.mxu0 %v1299
    %1571 = vmatprep.subr.bf16.mxu0 0
    %1572 = vmatpush1.bf16.msra.mxu0 %v1300
    %1573 = vmatprep.subr.bf16.mxu0 0
    %1574 = vmatpush1.bf16.msra.mxu0 %v1301
    %1575 = vmatprep.subr.bf16.mxu0 0
    %1576 = vmatpush1.bf16.msra.mxu0 %v1302
    %1577 = vmatprep.subr.bf16.mxu0 0
    %1578 = vmatpush1.bf16.msra.mxu0 %v1303
    %1579 = vmatprep.subr.bf16.mxu0 0
    %1580 = vmatpush1.bf16.msra.mxu0 %v1304
    %1581 = vmatprep.subr.bf16.mxu0 0
    %1582 = vmatpush1.bf16.msra.mxu0 %v1305
    %1583 = vmatprep.subr.bf16.mxu0 0
    %1584 = vmatpush1.bf16.msra.mxu0 %v1306
    %1585 = vmatprep.subr.bf16.mxu0 0
    %1586 = vmatpush1.bf16.msra.mxu0 %v1307
    %1587 = vmatprep.subr.bf16.mxu0 0
    %1588 = vmatpush1.bf16.msra.mxu0 %v1308
    %1589 = vmatprep.mubr.bf16.mxu0 %v660
    %1590 = vmatmul.mubr.bf16.gmra.mrb[0].mxu0 %v659
    %v1591 = vpop.f32.mrb[0].mxu0
    %v1592 = vadd.f32 %v1552, %v1591
    %v1593 = vpop.f32.mrb[0].mxu0
    %v1594 = vpop.f32.mrb[0].mxu0
    %v1595 = vpop.f32.mrb[0].mxu0
    %1596 = vdwg.mxu0
    %1597 = vmatprep.subr.bf16.mxu0 0
    %1598 = vmatpush1.bf16.msra.mxu0 %v1309
    %1599 = vmatprep.subr.bf16.mxu0 0
    %1600 = vmatpush1.bf16.msra.mxu0 %v1310
    %1601 = vmatprep.subr.bf16.mxu0 0
    %1602 = vmatpush1.bf16.msra.mxu0 %v1311
    %1603 = vmatprep.subr.bf16.mxu0 0
    %1604 = vmatpush1.bf16.msra.mxu0 %v1312
    %1605 = vmatprep.subr.bf16.mxu0 0
    %1606 = vmatpush1.bf16.msra.mxu0 %v1313
    %1607 = vmatprep.subr.bf16.mxu0 0
    %1608 = vmatpush1.bf16.msra.mxu0 %v1314
    %1609 = vmatprep.subr.bf16.mxu0 0
    %1610 = vmatpush1.bf16.msra.mxu0 %v1315
    %1611 = vmatprep.subr.bf16.mxu0 0
    %1612 = vmatpush1.bf16.msra.mxu0 %v1316
    %1613 = vmatprep.subr.bf16.mxu0 0
    %1614 = vmatpush1.bf16.msra.mxu0 %v1317
    %1615 = vmatprep.subr.bf16.mxu0 0
    %1616 = vmatpush1.bf16.msra.mxu0 %v1318
    %1617 = vmatprep.subr.bf16.mxu0 0
    %1618 = vmatpush1.bf16.msra.mxu0 %v1319
    %1619 = vmatprep.subr.bf16.mxu0 0
    %1620 = vmatpush1.bf16.msra.mxu0 %v1320
    %1621 = vmatprep.subr.bf16.mxu0 0
    %1622 = vmatpush1.bf16.msra.mxu0 %v1321
    %1623 = vmatprep.subr.bf16.mxu0 0
    %1624 = vmatpush1.bf16.msra.mxu0 %v1322
    %1625 = vmatprep.subr.bf16.mxu0 0
    %1626 = vmatpush1.bf16.msra.mxu0 %v1323
    %1627 = vmatprep.subr.bf16.mxu0 0
    %1628 = vmatpush1.bf16.msra.mxu0 %v1324
    %1629 = vmatprep.mubr.bf16.mxu0 %v662
    %1630 = vmatmul.mubr.bf16.gmra.mrb[0].mxu0 %v661
    %v1631 = vpop.f32.mrb[0].mxu0
    %v1632 = vadd.f32 %v1592, %v1631
    %v1633 = vpop.f32.mrb[0].mxu0
    %v1634 = vpop.f32.mrb[0].mxu0
    %v1635 = vpop.f32.mrb[0].mxu0
    %1636 = vdwg.mxu0
    %1637 = vmatprep.subr.bf16.mxu0 0
    %1638 = vmatpush1.bf16.msra.mxu0 %v1325
    %1639 = vmatprep.subr.bf16.mxu0 0
    %1640 = vmatpush1.bf16.msra.mxu0 %v1326
    %1641 = vmatprep.subr.bf16.mxu0 0
    %1642 = vmatpush1.bf16.msra.mxu0 %v1327
    %1643 = vmatprep.subr.bf16.mxu0 0
    %1644 = vmatpush1.bf16.msra.mxu0 %v1328
    %1645 = vmatprep.subr.bf16.mxu0 0
    %1646 = vmatpush1.bf16.msra.mxu0 %v1329
    %1647 = vmatprep.subr.bf16.mxu0 0
    %1648 = vmatpush1.bf16.msra.mxu0 %v1330
    %1649 = vmatprep.subr.bf16.mxu0 0
    %1650 = vmatpush1.bf16.msra.mxu0 %v1331
    %1651 = vmatprep.subr.bf16.mxu0 0
    %1652 = vmatpush1.bf16.msra.mxu0 %v1332
    %1653 = vmatprep.subr.bf16.mxu0 0
    %1654 = vmatpush1.bf16.msra.mxu0 %v1333
    %1655 = vmatprep.subr.bf16.mxu0 0
    %1656 = vmatpush1.bf16.msra.mxu0 %v1334
    %1657 = vmatprep.subr.bf16.mxu0 0
    %1658 = vmatpush1.bf16.msra.mxu0 %v1335
    %1659 = vmatprep.subr.bf16.mxu0 0
    %1660 = vmatpush1.bf16.msra.mxu0 %v1336
    %1661 = vmatprep.subr.bf16.mxu0 0
    %1662 = vmatpush1.bf16.msra.mxu0 %v1337
    %1663 = vmatprep.subr.bf16.mxu0 0
    %1664 = vmatpush1.bf16.msra.mxu0 %v1338
    %1665 = vmatprep.subr.bf16.mxu0 0
    %1666 = vmatpush1.bf16.msra.mxu0 %v1339
    %1667 = vmatprep.subr.bf16.mxu0 0
    %1668 = vmatpush1.bf16.msra.mxu0 %v1340
    %1669 = vmatprep.mubr.bf16.mxu0 %v664
    %1670 = vmatmul.mubr.bf16.gmra.mrb[0].mxu0 %v663
    %v1671 = vpop.f32.mrb[0].mxu0
    %v1672 = vadd.f32 %v1632, %v1671
    %v1673 = vpop.f32.mrb[0].mxu0
    %v1674 = vpop.f32.mrb[0].mxu0
    %v1675 = vpop.f32.mrb[0].mxu0
    %1676 = vdwg.mxu0
    %1677 = vst.msk [vmem:[#allocation2] sm:$0xff] %vm133, %v1672
    // Predicated region
    $region22: #{tpu_custom_call.1} parent=1 // pred_check
      _
    $region23: #{tpu_custom_call.1} parent=1 // pred_check_branch
      %1679 = sbr.rel (0) target = $region25
    $region24: #{tpu_custom_call.1} parent=1 // pred_region
      %s1681 = ssub.s32 128, 128
      %1682 = vsyncadd [#allocation3], %s1681
      %s1684 = sshll.u32 [#allocation2], 4
      %s1685 = int_to_ptr.vmem [resolvable:$true] %s1684
      %1687 = dma.vmem_to_hbm [thread:$0]  %s1685, 128, %s5, [#allocation3]
    $region25: #{tpu_custom_call.1} parent=1 // pred_fallthru
      _
    // Predicated region
    $region26: #{tpu_custom_call.1} parent=1 // pred_check
      _
    $region27: #{tpu_custom_call.1} parent=1 // pred_check_branch
      %1689 = sbr.rel (0) target = $region29
    $region28: #{tpu_custom_call.1} parent=1 // pred_region
      %1690 = dma.done [#allocation3], 128
    $region29: #{tpu_custom_call.1} parent=1 // pred_fallthru
      _
    %1691 = vsyncpa [#allocation3], 1

</llo_original>
